<compile_context>
chip_gen: v6e
topology: v6e:2x2x1
jax: 0.10.0
libtpu: 0.0.40
codegen_flags: <defaults>
</compile_context>

<pallas_src>
import jax
import jax.numpy as jnp
from jax.experimental import pallas as pl
from jax.experimental.pallas import tpu as pltpu


# ----------------------------- small helpers --------------------------------

def _round_up(n, m):
    return ((n + m - 1) // m) * m


def _padded_bytes(rows, cols, itemsize):
    """VMEM bytes of a (rows, cols) buffer with lane (128) / sublane padding."""
    sublane = {4: 8, 2: 16, 1: 32}[itemsize]
    return _round_up(max(rows, 1), sublane) * _round_up(max(cols, 1), 128) * itemsize


def _device_kind():
    try:
        return jax.devices()[0].device_kind.lower()
    except Exception:
        return ""


def _default_fold():
    """Fold factor: fill the MXU contraction width.  256-wide MXU (v6e/v7x) -> 8,
    128-wide MXU (v5e and earlier) -> 4."""
    kind = _device_kind()
    if any(t in kind for t in ("v2", "v3", "v4", "v5e", "v5 lite", "v5lite")):
        return 4
    return 8


def _batch_semantics():
    """On v7x (2 TensorCores/chip) ask for an explicit core split of the batch
    axis; elsewhere plain 'parallel'."""
    if "v7" in _device_kind():
        return (pltpu.CORE_PARALLEL,)
    return ("parallel",)


# ------------------------------- kernel -------------------------------------

def _mlp_kernel(x_ref, w1_ref, b1_ref, w2_ref, b2_ref, w3_ref, b3_ref, o_ref):
    # In-kernel f32 -> bf16 cast of the activation tile: free VPU work under the
    # MXU, and removes the extra wrapper-side HBM read/write of x.
    x = x_ref[...].astype(jnp.bfloat16)
    # Packed layer 1: (tb, F*num_in) @ blockdiag(W1 x F) -> (tb, F*128), f32 acc.
    h1 = jnp.dot(x, w1_ref[...], preferred_element_type=jnp.float32)
    h1 = jnp.maximum(h1 + b1_ref[...], 0.0)
    # Packed layer 2: (tb, F*128) @ blockdiag(W2 x F) -> (tb, F*32).
    h2 = jnp.dot(h1.astype(jnp.bfloat16), w2_ref[...],
                 preferred_element_type=jnp.float32)
    h2 = jnp.maximum(h2 + b2_ref[...], 0.0)
    # Packed layer 3: (tb, F*32) @ blockdiag(W3 x F) -> (tb, F*num_out).
    out = jnp.dot(h2.astype(jnp.bfloat16), w3_ref[...],
                  preferred_element_type=jnp.float32)
    o_ref[...] = (out + b3_ref[...]).astype(o_ref.dtype)


# ------------------------------- wrapper -------------------------------------

def prepare_params(params, fold=None):
    """One-time (hoisted) parameter prep: bf16 block-diagonal weights and f32
    tiled biases.  Call once and reuse across batches (avoids re-materializing
    params every call).  Weights are stored (in, out) so the kernel computes
    x @ W + b (== PyTorch's x @ W.T + b)."""
    if fold is None:
        fold = _default_fold()
    fold = int(fold)
    num_in = int(params["w1"].shape[0])
    num_out = int(params["w3"].shape[1])
    prepped = {"fold": fold, "num_in": num_in, "num_out": num_out}
    eye = jnp.eye(fold, dtype=jnp.float32)
    for i in (1, 2, 3):
        w = params[f"w{i}"].astype(jnp.float32)
        b = params[f"b{i}"].astype(jnp.float32).reshape(1, -1)
        # kron(I_F, W) = block-diagonal stack of F copies of W: (F*in, F*out).
        prepped[f"w{i}"] = jnp.kron(eye, w).astype(jnp.bfloat16)
        prepped[f"b{i}"] = jnp.tile(b, (1, fold))
    return prepped


def representation_transformation(x, prepped, *, block_rows=8192):
    """Fused 3-layer MLP (eval-mode RepresentationTransformation forward).

    x: (B, num_in) float32.  prepped: output of prepare_params().
    block_rows: target tile size in ORIGINAL rows (packed tile = block_rows/F).
    """
    F = prepped["fold"]
    num_in = prepped["num_in"]
    num_out = prepped["num_out"]
    w1, b1 = prepped["w1"], prepped["b1"]
    w2, b2 = prepped["w2"], prepped["b2"]
    w3, b3 = prepped["w3"], prepped["b3"]

    B, ni = x.shape
    assert ni == num_in, f"expected num_in={num_in}, got {ni}"
    out_dtype = x.dtype

    Kp = F * num_in          # packed layer-1 contraction width
    H1p = w1.shape[1]        # F * 128
    H2p = w2.shape[1]        # F * 32
    Np = w3.shape[1]         # F * num_out

    # Fold the batch: pad B to a multiple of F, then (B, num_in) -> (Bp, F*num_in).
    # Row-major reshape is contiguous => free.
    Bp = pl.cdiv(B, F)
    if Bp * F != B:
        x = jnp.pad(x, ((0, Bp * F - B), (0, 0)))
    xp = x.reshape(Bp, Kp)

    # Lane/sublane-padded VMEM footprint for a packed-row tile of tb rows.
    def footprint(tb):
        return (
            2 * _padded_bytes(tb, Kp, 4)                       # x tiles (f32, 2 bufs)
            + 2 * _padded_bytes(tb, Np, 4)                     # out tiles (f32, 2 bufs)
            + _padded_bytes(tb, H1p, 4) + _padded_bytes(tb, H2p, 4)   # f32 h1/h2
            + _padded_bytes(tb, Kp, 2) + _padded_bytes(tb, H1p, 2)
            + _padded_bytes(tb, H2p, 2)                        # bf16 cast temporaries
            + _padded_bytes(Kp, H1p, 2) + _padded_bytes(H1p, H2p, 2)
            + _padded_bytes(H2p, Np, 2)                        # resident bf16 weights
            + _padded_bytes(1, H1p, 4) + _padded_bytes(1, H2p, 4)
            + _padded_bytes(1, Np, 4)                          # resident f32 biases
        )

    # Packed-row tile: minimize tail padding (don't blindly use block_rows),
    # multiple of 8 (f32 sublanes), shrink if the VMEM footprint exceeds the
    # budget (kept well under v7x's 64 MiB physical VMEM).
    tb_req = max(8, block_rows // F)
    nsteps = max(1, pl.cdiv(Bp, tb_req))
    tb = _round_up(pl.cdiv(Bp, nsteps), 8)
    VMEM_BUDGET = 36 * 1024 * 1024
    while tb > 8 and footprint(tb) > VMEM_BUDGET:
        tb = max(8, _round_up(tb // 2, 8))

    grid_b = pl.cdiv(Bp, tb)
    bp_pad = grid_b * tb
    if bp_pad != Bp:
        xp = jnp.pad(xp, ((0, bp_pad - Bp), (0, 0)))

    vmem_limit = int(min(50 * 1024 * 1024,
                         max(footprint(tb) + 8 * 1024 * 1024, 16 * 1024 * 1024)))

    cost = pl.CostEstimate(
        flops=2 * bp_pad * (Kp * H1p + H1p * H2p + H2p * Np),
        transcendentals=0,
        bytes_accessed=(bp_pad * Kp * 4                              # read x (f32)
                        + (Kp * H1p + H1p * H2p + H2p * Np) * 2      # bf16 weights
                        + (H1p + H2p + Np) * 4                       # f32 biases
                        + bp_pad * Np * 4),                          # write out (f32)
    )

    def resident(a):
        nd = a.ndim
        return pl.BlockSpec(a.shape, lambda i: (0,) * nd)

    def run(semantics):
        return pl.pallas_call(
            _mlp_kernel,
            out_shape=jax.ShapeDtypeStruct((bp_pad, Np), out_dtype),
            grid=(grid_b,),
            in_specs=[
                pl.BlockSpec((tb, Kp), lambda i: (i, 0)),    # packed x: tiled over rows
                resident(w1), resident(b1),                  # weights/biases stay
                resident(w2), resident(b2),                  # VMEM-resident across
                resident(w3), resident(b3),                  # all grid steps
            ],
            out_specs=pl.BlockSpec((tb, Np), lambda i: (i, 0)),
            compiler_params=pltpu.CompilerParams(
                dimension_semantics=semantics,
                vmem_limit_bytes=vmem_limit,
            ),
            cost_estimate=cost,
        )(xp, w1, b1, w2, b2, w3, b3)

    semantics = _batch_semantics()
    try:
        out_packed = run(semantics)
    except Exception:
        if semantics == ("parallel",):
            raise
        out_packed = run(("parallel",))   # safe fallback if CORE_PARALLEL rejected

    # Unpack (contiguous reshape) and drop padded rows.
    return out_packed.reshape(bp_pad * F, num_out)[:B]


# ------------------------------ params / refs --------------------------------

def init_params(key, num_in=32, num_out=10, dtype=jnp.float32):
    """Deterministic init matching PyTorch nn.Linear default (uniform +-1/sqrt(fan_in)).
    Weights stored (in, out); biases kept 2-D (1, out) for clean lane broadcast."""
    dims = [(num_in, 128), (128, 32), (32, num_out)]
    params = {}
    for i, (fan_in, fan_out) in enumerate(dims, start=1):
        key, kw, kb = jax.random.split(key, 3)
        bound = 1.0 / (fan_in ** 0.5)
        params[f"w{i}"] = jax.random.uniform(
            kw, (fan_in, fan_out), dtype, minval=-bound, maxval=bound)
        params[f"b{i}"] = jax.random.uniform(
            kb, (1, fan_out), dtype, minval=-bound, maxval=bound)
    return params


def _reference_bf16(x, p):
    """Pure-JAX reference mirroring kernel numerics (bf16 MXU inputs, f32 acc)."""
    h = x.astype(jnp.bfloat16)
    h = jnp.maximum(jnp.dot(h, p["w1"].astype(jnp.bfloat16),
                            preferred_element_type=jnp.float32) + p["b1"], 0.0)
    h = jnp.maximum(jnp.dot(h.astype(jnp.bfloat16), p["w2"].astype(jnp.bfloat16),
                            preferred_element_type=jnp.float32) + p["b2"], 0.0)
    out = jnp.dot(h.astype(jnp.bfloat16), p["w3"].astype(jnp.bfloat16),
                  preferred_element_type=jnp.float32) + p["b3"]
    return out.astype(x.dtype)


def _reference_f32(x, p):
    """Full-f32 forward, exactly matching the PyTorch module (precision check)."""
    h = jnp.maximum(x @ p["w1"] + p["b1"], 0.0)
    h = jnp.maximum(h @ p["w2"] + p["b2"], 0.0)
    return (h @ p["w3"] + p["b3"]).astype(x.dtype)


# ---------------------------------- main --------------------------------------

if __name__ == "__main__":
    key = jax.random.PRNGKey(0)
    k_x, k_p = jax.random.split(key)

    # Shapes consistent with the module defaults (num_in=32, num_out=10).
    B, num_in, num_out = 8, 32, 10
    x = jax.random.normal(k_x, (B, num_in), jnp.float32)
    raw_params = init_params(k_p, num_in=num_in, num_out=num_out)

    # Hoisted one-time prep: bf16 block-diagonal weights + tiled biases.
    prepped = prepare_params(raw_params)

    out = jax.block_until_ready(representation_transformation(x, prepped))
    assert out.shape == (B, num_out)
    assert jnp.allclose(out, _reference_bf16(x, raw_params), atol=1e-3, rtol=1e-3), \
        "mismatch vs bf16-numerics reference (B=8)"
    # Sanity check against the true f32 PyTorch-equivalent forward at bf16 tolerance.
    assert jnp.allclose(out, _reference_f32(x, raw_params), atol=5e-2, rtol=5e-2), \
        "mismatch vs f32 reference beyond bf16 tolerance (B=8)"

    # Exercise the multi-tile grid path + ragged batch (B not a multiple of fold/tile).
    B2 = 300
    x2 = jax.random.normal(jax.random.PRNGKey(1), (B2, num_in), jnp.float32)
    out2 = jax.block_until_ready(
        representation_transformation(x2, prepped, block_rows=128))
    assert out2.shape == (B2, num_out)
    assert jnp.allclose(out2, _reference_bf16(x2, raw_params), atol=1e-3, rtol=1e-3), \
        "mismatch vs bf16-numerics reference (B=300)"

    # TODO(synk): nn.Dropout(0.5) branches are train-mode only; the eval forward is
    # exactly this MLP, so dropout is intentionally omitted.
    print("KERNEL_OK")
</pallas_src>

<mosaic_0001>
module attributes {stable_mosaic.version = 11 : i64} {
  func.func @_mlp_kernel(%arg0: i32, %arg1: memref<8x256xf32, #tpu.memory_space<vmem>>, %arg2: memref<256x1024xbf16, #tpu.memory_space<vmem>>, %arg3: memref<1x1024xf32, #tpu.memory_space<vmem>>, %arg4: memref<1024x256xbf16, #tpu.memory_space<vmem>>, %arg5: memref<1x256xf32, #tpu.memory_space<vmem>>, %arg6: memref<256x80xbf16, #tpu.memory_space<vmem>>, %arg7: memref<1x80xf32, #tpu.memory_space<vmem>>, %arg8: memref<8x80xf32, #tpu.memory_space<vmem>>) attributes {dimension_semantics = [#tpu.dimension_semantics<parallel>], iteration_bounds = array<i64: 1>, scalar_prefetch = 0 : i64, scratch_operands = 0 : i64, tpu.core_type = #tpu.core_type<tc>, window_params = [{transform_indices = @transform_0, window_bounds = array<i64: 8, 256>}, {pipeline_mode = #tpu.pipeline_mode<synchronous>, transform_indices = @transform_1, window_bounds = array<i64: 256, 1024>}, {pipeline_mode = #tpu.pipeline_mode<synchronous>, transform_indices = @transform_2, window_bounds = array<i64: 1, 1024>}, {pipeline_mode = #tpu.pipeline_mode<synchronous>, transform_indices = @transform_3, window_bounds = array<i64: 1024, 256>}, {pipeline_mode = #tpu.pipeline_mode<synchronous>, transform_indices = @transform_4, window_bounds = array<i64: 1, 256>}, {pipeline_mode = #tpu.pipeline_mode<synchronous>, transform_indices = @transform_5, window_bounds = array<i64: 256, 80>}, {pipeline_mode = #tpu.pipeline_mode<synchronous>, transform_indices = @transform_6, window_bounds = array<i64: 1, 80>}, {transform_indices = @transform_7, window_bounds = array<i64: 8, 80>}]} {
    %c0 = arith.constant 0 : index
    %c0_0 = arith.constant 0 : index
    %0 = vector.load %arg1[%c0, %c0_0] : memref<8x256xf32, #tpu.memory_space<vmem>>, vector<8x256xf32>
    %1 = arith.truncf %0 : vector<8x256xf32> to vector<8x256xbf16>
    %c0_1 = arith.constant 0 : index
    %c0_2 = arith.constant 0 : index
    %2 = vector.load %arg2[%c0_1, %c0_2] : memref<256x1024xbf16, #tpu.memory_space<vmem>>, vector<256x1024xbf16>
    %cst = arith.constant dense<0.000000e+00> : vector<8x1024xf32>
    %3 = tpu.matmul %1, %2, %cst {dimension_numbers = #tpu.dot_dimension_numbers<[1], [0], [0], [1], [0, 0, 1, 1], [], []>} : vector<8x256xbf16>, vector<256x1024xbf16>, vector<8x1024xf32> -> vector<8x1024xf32>
    %c0_3 = arith.constant 0 : index
    %c0_4 = arith.constant 0 : index
    %4 = vector.load %arg3[%c0_3, %c0_4] : memref<1x1024xf32, #tpu.memory_space<vmem>>, vector<1x1024xf32>
    %5 = vector.broadcast %4 : vector<1x1024xf32> to vector<8x1024xf32>
    %6 = arith.addf %3, %5 : vector<8x1024xf32>
    %cst_5 = arith.constant 0.000000e+00 : f32
    %7 = vector.broadcast %cst_5 : f32 to vector<8x1024xf32>
    %8 = arith.maximumf %6, %7 : vector<8x1024xf32>
    %9 = arith.truncf %8 : vector<8x1024xf32> to vector<8x1024xbf16>
    %c0_6 = arith.constant 0 : index
    %c0_7 = arith.constant 0 : index
    %10 = vector.load %arg4[%c0_6, %c0_7] : memref<1024x256xbf16, #tpu.memory_space<vmem>>, vector<1024x256xbf16>
    %cst_8 = arith.constant dense<0.000000e+00> : vector<8x256xf32>
    %11 = tpu.matmul %9, %10, %cst_8 {dimension_numbers = #tpu.dot_dimension_numbers<[1], [0], [0], [1], [0, 0, 1, 1], [], []>} : vector<8x1024xbf16>, vector<1024x256xbf16>, vector<8x256xf32> -> vector<8x256xf32>
    %c0_9 = arith.constant 0 : index
    %c0_10 = arith.constant 0 : index
    %12 = vector.load %arg5[%c0_9, %c0_10] : memref<1x256xf32, #tpu.memory_space<vmem>>, vector<1x256xf32>
    %13 = vector.broadcast %12 : vector<1x256xf32> to vector<8x256xf32>
    %14 = arith.addf %11, %13 : vector<8x256xf32>
    %cst_11 = arith.constant 0.000000e+00 : f32
    %15 = vector.broadcast %cst_11 : f32 to vector<8x256xf32>
    %16 = arith.maximumf %14, %15 : vector<8x256xf32>
    %17 = arith.truncf %16 : vector<8x256xf32> to vector<8x256xbf16>
    %c0_12 = arith.constant 0 : index
    %c0_13 = arith.constant 0 : index
    %18 = vector.load %arg6[%c0_12, %c0_13] : memref<256x80xbf16, #tpu.memory_space<vmem>>, vector<256x80xbf16>
    %cst_14 = arith.constant dense<0.000000e+00> : vector<8x80xf32>
    %19 = tpu.matmul %17, %18, %cst_14 {dimension_numbers = #tpu.dot_dimension_numbers<[1], [0], [0], [1], [0, 0, 1, 1], [], []>} : vector<8x256xbf16>, vector<256x80xbf16>, vector<8x80xf32> -> vector<8x80xf32>
    %c0_15 = arith.constant 0 : index
    %c0_16 = arith.constant 0 : index
    %20 = vector.load %arg7[%c0_15, %c0_16] : memref<1x80xf32, #tpu.memory_space<vmem>>, vector<1x80xf32>
    %21 = vector.broadcast %20 : vector<1x80xf32> to vector<8x80xf32>
    %22 = arith.addf %19, %21 : vector<8x80xf32>
    %c0_17 = arith.constant 0 : index
    %c0_18 = arith.constant 0 : index
    %23 = vector.load %arg8[%c0_17, %c0_18] : memref<8x80xf32, #tpu.memory_space<vmem>>, vector<8x80xf32>
    tpu.vector_store %arg8[%c0_17, %c0_18], %22 {strides = array<i32>} : memref<8x80xf32, #tpu.memory_space<vmem>>, vector<8x80xf32>,
    return
  }
  func.func @transform_0(%arg0: i32) -> (i32, i32) {
    %c0_i32 = arith.constant 0 : i32
    %c0_i32_0 = arith.constant 0 : i32
    return %arg0, %c0_i32 : i32, i32
  }
  func.func @transform_1(%arg0: i32) -> (i32, i32) {
    %c0_i32 = arith.constant 0 : i32
    %c0_i32_0 = arith.constant 0 : i32
    %c0_i32_1 = arith.constant 0 : i32
    return %c0_i32, %c0_i32_0 : i32, i32
  }
  func.func @transform_2(%arg0: i32) -> (i32, i32) {
    %c0_i32 = arith.constant 0 : i32
    %c0_i32_0 = arith.constant 0 : i32
    %c0_i32_1 = arith.constant 0 : i32
    return %c0_i32, %c0_i32_0 : i32, i32
  }
  func.func @transform_3(%arg0: i32) -> (i32, i32) {
    %c0_i32 = arith.constant 0 : i32
    %c0_i32_0 = arith.constant 0 : i32
    %c0_i32_1 = arith.constant 0 : i32
    return %c0_i32, %c0_i32_0 : i32, i32
  }
  func.func @transform_4(%arg0: i32) -> (i32, i32) {
    %c0_i32 = arith.constant 0 : i32
    %c0_i32_0 = arith.constant 0 : i32
    %c0_i32_1 = arith.constant 0 : i32
    return %c0_i32, %c0_i32_0 : i32, i32
  }
  func.func @transform_5(%arg0: i32) -> (i32, i32) {
    %c0_i32 = arith.constant 0 : i32
    %c0_i32_0 = arith.constant 0 : i32
    %c0_i32_1 = arith.constant 0 : i32
    return %c0_i32, %c0_i32_0 : i32, i32
  }
  func.func @transform_6(%arg0: i32) -> (i32, i32) {
    %c0_i32 = arith.constant 0 : i32
    %c0_i32_0 = arith.constant 0 : i32
    %c0_i32_1 = arith.constant 0 : i32
    return %c0_i32, %c0_i32_0 : i32, i32
  }
  func.func @transform_7(%arg0: i32) -> (i32, i32) {
    %c0_i32 = arith.constant 0 : i32
    %c0_i32_0 = arith.constant 0 : i32
    return %arg0, %c0_i32 : i32, i32
  }
}

</mosaic_0001>

<llo_original>
// kernel: tpu_custom_call.1
$region0: #{tpu_custom_call.1}
  #allocation0 [shape = 'u32[]', space=smem, size = 0x4, offset = 0x4, fixed_abs, tag = 'smem constant byte address 0x4 - core index']
  #allocation1 [shape = 'u32[144,128]{1,0:T(1,128)}', space=vmem, size = 0x12000, scoped, tag = 'internal scratch']
  %s0 = inlined_call_operand.vmem [shape: f32[8,256], index: 0, kind: input, shape index: {}]
  %s1 = inlined_call_operand.hbm [shape: bf16[256,1024], index: 1, kind: input, shape index: {}]
  %s2 = inlined_call_operand.vmem [shape: f32[1,1024], index: 2, kind: input, shape index: {}]
  %s3 = inlined_call_operand.hbm [shape: bf16[1024,256], index: 3, kind: input, shape index: {}]
  %s4 = inlined_call_operand.vmem [shape: f32[1,256], index: 4, kind: input, shape index: {}]
  %s5 = inlined_call_operand.vmem [shape: bf16[256,80], index: 5, kind: input, shape index: {}]
  %s6 = inlined_call_operand.vmem [shape: f32[1,80], index: 6, kind: input, shape index: {}]
  %s7 = inlined_call_operand.hbm [shape: f32[8,80], index: 7, kind: output, shape index: {}]
  %s8 = sld [smem:[#allocation0]]
  $region46: #{tpu_custom_call.1} parent=0
    _
  %s10 = ssub.s32 1, %s8
  %s11 = scalar_select 0, %s10, %s8
  $region1: #{tpu_custom_call.1} parent=0
    #allocation2 [shape = 'u8[524288]{0}', space=vmem, size = 0x80000, scoped, tag = 'input window, operand 1, single buffered']
    #allocation3 [shape = 's32[1]{0}', space=sflag, size = 0x4, scoped, tag = 'scoped memory for tpu_custom_call.1']
    #allocation4 [shape = 's32[1]{0}', space=sflag, size = 0x4, scoped, tag = 'scoped memory for tpu_custom_call.1']
    #allocation5 [shape = 'u8[524288]{0}', space=vmem, size = 0x80000, scoped, tag = 'input window, operand 3, single buffered']
    #allocation6 [shape = 's32[1]{0}', space=sflag, size = 0x4, scoped, tag = 'scoped memory for tpu_custom_call.1']
    #allocation7 [shape = 'u8[4096]{0}', space=vmem, size = 0x1000, scoped, tag = 'output window, operand 0, single buffered']
    %12 = vsyncpa [#allocation3], 0
    %13 = vsyncpa [#allocation6], 0
    %14 = vsyncpa [#allocation4], 0
    // Predicated region
    $region2: #{tpu_custom_call.1} parent=1 // pred_check
      _
    $region3: #{tpu_custom_call.1} parent=1 // pred_check_branch
      %16 = sbr.rel (0) target = $region5
    $region4: #{tpu_custom_call.1} parent=1 // pred_region
      _
    $region5: #{tpu_custom_call.1} parent=1 // pred_fallthru
      _
    // Predicated region
    $region6: #{tpu_custom_call.1} parent=1 // pred_check
      _
    $region7: #{tpu_custom_call.1} parent=1 // pred_check_branch
      %18 = sbr.rel (0) target = $region9
    $region8: #{tpu_custom_call.1} parent=1 // pred_region
      %s20 = ssub.s32 16384, 16384
      %21 = vsyncadd [#allocation3], %s20
      %s22 = sshll.u32 [#allocation2], 4
      %s23 = int_to_ptr.vmem [resolvable:$true] %s22
      %28 = dma.hbm_to_vmem [thread:$0]  %s1, 16384, %s23, [#allocation3], 512, 512, 32
    $region9: #{tpu_custom_call.1} parent=1 // pred_fallthru
      _
    // Predicated region
    $region10: #{tpu_custom_call.1} parent=1 // pred_check
      _
    $region11: #{tpu_custom_call.1} parent=1 // pred_check_branch
      %30 = sbr.rel (0) target = $region13
    $region12: #{tpu_custom_call.1} parent=1 // pred_region
      _
    $region13: #{tpu_custom_call.1} parent=1 // pred_fallthru
      _
    // Predicated region
    $region14: #{tpu_custom_call.1} parent=1 // pred_check
      _
    $region15: #{tpu_custom_call.1} parent=1 // pred_check_branch
      %32 = sbr.rel (0) target = $region17
    $region16: #{tpu_custom_call.1} parent=1 // pred_region
      %s34 = ssub.s32 16384, 16384
      %35 = vsyncadd [#allocation6], %s34
      %s36 = sshll.u32 [#allocation5], 4
      %s37 = int_to_ptr.vmem [resolvable:$true] %s36
      %42 = dma.hbm_to_vmem [thread:$0]  %s3, 16384, %s37, [#allocation6], 128, 128, 8
    $region17: #{tpu_custom_call.1} parent=1 // pred_fallthru
      _
    // Predicated region
    $region18: #{tpu_custom_call.1} parent=1 // pred_check
      _
    $region19: #{tpu_custom_call.1} parent=1 // pred_check_branch
      %44 = sbr.rel (0) target = $region21
    $region20: #{tpu_custom_call.1} parent=1 // pred_region
      _
    $region21: #{tpu_custom_call.1} parent=1 // pred_fallthru
      _
    // Predicated region
    $region22: #{tpu_custom_call.1} parent=1 // pred_check
      _
    $region23: #{tpu_custom_call.1} parent=1 // pred_check_branch
      %46 = sbr.rel (0) target = $region25
    $region24: #{tpu_custom_call.1} parent=1 // pred_region
      _
    $region25: #{tpu_custom_call.1} parent=1 // pred_fallthru
      _
    // Predicated region
    $region26: #{tpu_custom_call.1} parent=1 // pred_check
      _
    $region27: #{tpu_custom_call.1} parent=1 // pred_check_branch
      %48 = sbr.rel (0) target = $region29
    $region28: #{tpu_custom_call.1} parent=1 // pred_region
      _
    $region29: #{tpu_custom_call.1} parent=1 // pred_fallthru
      _
    // Predicated region
    $region30: #{tpu_custom_call.1} parent=1 // pred_check
      _
    $region31: #{tpu_custom_call.1} parent=1 // pred_check_branch
      %50 = sbr.rel (0) target = $region33
    $region32: #{tpu_custom_call.1} parent=1 // pred_region
      %51 = dma.done [#allocation3], 16384
    $region33: #{tpu_custom_call.1} parent=1 // pred_fallthru
      _
    // Predicated region
    $region34: #{tpu_custom_call.1} parent=1 // pred_check
      _
    $region35: #{tpu_custom_call.1} parent=1 // pred_check_branch
      %53 = sbr.rel (0) target = $region37
    $region36: #{tpu_custom_call.1} parent=1 // pred_region
      %54 = dma.done [#allocation6], 16384
    $region37: #{tpu_custom_call.1} parent=1 // pred_fallthru
      _
    %v56 = vld [vmem:[%s0] sm:$0xff]
    %v57 = vld [vmem:[%s0 + $0x8] sm:$0xff]
    %v58 = vpack.c.bf16 %v56, %v56
    %v59 = vpack.c.bf16 %v57, %v57
    %v60 = vld [vmem:[#allocation2] sm:$0xff]
    %v61 = vld [vmem:[#allocation2 + $0x8] sm:$0xff]
    %v62 = vld [vmem:[#allocation2 + $0x10] sm:$0xff]
    %v63 = vld [vmem:[#allocation2 + $0x18] sm:$0xff]
    %v64 = vld [vmem:[#allocation2 + $0x20] sm:$0xff]
    %v65 = vld [vmem:[#allocation2 + $0x28] sm:$0xff]
    %v66 = vld [vmem:[#allocation2 + $0x30] sm:$0xff]
    %v67 = vld [vmem:[#allocation2 + $0x38] sm:$0xff]
    %v68 = vld [vmem:[#allocation2 + $0x40] sm:$0xff]
    %v69 = vld [vmem:[#allocation2 + $0x48] sm:$0xff]
    %v70 = vld [vmem:[#allocation2 + $0x50] sm:$0xff]
    %v71 = vld [vmem:[#allocation2 + $0x58] sm:$0xff]
    %v72 = vld [vmem:[#allocation2 + $0x60] sm:$0xff]
    %v73 = vld [vmem:[#allocation2 + $0x68] sm:$0xff]
    %v74 = vld [vmem:[#allocation2 + $0x70] sm:$0xff]
    %v75 = vld [vmem:[#allocation2 + $0x78] sm:$0xff]
    %v76 = vld [vmem:[#allocation2 + $0x80] sm:$0xff]
    %v77 = vld [vmem:[#allocation2 + $0x88] sm:$0xff]
    %v78 = vld [vmem:[#allocation2 + $0x90] sm:$0xff]
    %v79 = vld [vmem:[#allocation2 + $0x98] sm:$0xff]
    %v80 = vld [vmem:[#allocation2 + $0xa0] sm:$0xff]
    %v81 = vld [vmem:[#allocation2 + $0xa8] sm:$0xff]
    %v82 = vld [vmem:[#allocation2 + $0xb0] sm:$0xff]
    %v83 = vld [vmem:[#allocation2 + $0xb8] sm:$0xff]
    %v84 = vld [vmem:[#allocation2 + $0xc0] sm:$0xff]
    %v85 = vld [vmem:[#allocation2 + $0xc8] sm:$0xff]
    %v86 = vld [vmem:[#allocation2 + $0xd0] sm:$0xff]
    %v87 = vld [vmem:[#allocation2 + $0xd8] sm:$0xff]
    %v88 = vld [vmem:[#allocation2 + $0xe0] sm:$0xff]
    %v89 = vld [vmem:[#allocation2 + $0xe8] sm:$0xff]
    %v90 = vld [vmem:[#allocation2 + $0xf0] sm:$0xff]
    %v91 = vld [vmem:[#allocation2 + $0xf8] sm:$0xff]
    %v92 = vld [vmem:[#allocation2 + $0x100] sm:$0xff]
    %v93 = vld [vmem:[#allocation2 + $0x108] sm:$0xff]
    %v94 = vld [vmem:[#allocation2 + $0x110] sm:$0xff]
    %v95 = vld [vmem:[#allocation2 + $0x118] sm:$0xff]
    %v96 = vld [vmem:[#allocation2 + $0x120] sm:$0xff]
    %v97 = vld [vmem:[#allocation2 + $0x128] sm:$0xff]
    %v98 = vld [vmem:[#allocation2 + $0x130] sm:$0xff]
    %v99 = vld [vmem:[#allocation2 + $0x138] sm:$0xff]
    %v100 = vld [vmem:[#allocation2 + $0x140] sm:$0xff]
    %v101 = vld [vmem:[#allocation2 + $0x148] sm:$0xff]
    %v102 = vld [vmem:[#allocation2 + $0x150] sm:$0xff]
    %v103 = vld [vmem:[#allocation2 + $0x158] sm:$0xff]
    %v104 = vld [vmem:[#allocation2 + $0x160] sm:$0xff]
    %v105 = vld [vmem:[#allocation2 + $0x168] sm:$0xff]
    %v106 = vld [vmem:[#allocation2 + $0x170] sm:$0xff]
    %v107 = vld [vmem:[#allocation2 + $0x178] sm:$0xff]
    %v108 = vld [vmem:[#allocation2 + $0x180] sm:$0xff]
    %v109 = vld [vmem:[#allocation2 + $0x188] sm:$0xff]
    %v110 = vld [vmem:[#allocation2 + $0x190] sm:$0xff]
    %v111 = vld [vmem:[#allocation2 + $0x198] sm:$0xff]
    %v112 = vld [vmem:[#allocation2 + $0x1a0] sm:$0xff]
    %v113 = vld [vmem:[#allocation2 + $0x1a8] sm:$0xff]
    %v114 = vld [vmem:[#allocation2 + $0x1b0] sm:$0xff]
    %v115 = vld [vmem:[#allocation2 + $0x1b8] sm:$0xff]
    %v116 = vld [vmem:[#allocation2 + $0x1c0] sm:$0xff]
    %v117 = vld [vmem:[#allocation2 + $0x1c8] sm:$0xff]
    %v118 = vld [vmem:[#allocation2 + $0x1d0] sm:$0xff]
    %v119 = vld [vmem:[#allocation2 + $0x1d8] sm:$0xff]
    %v120 = vld [vmem:[#allocation2 + $0x1e0] sm:$0xff]
    %v121 = vld [vmem:[#allocation2 + $0x1e8] sm:$0xff]
    %v122 = vld [vmem:[#allocation2 + $0x1f0] sm:$0xff]
    %v123 = vld [vmem:[#allocation2 + $0x1f8] sm:$0xff]
    %v124 = vld [vmem:[#allocation2 + $0x200] sm:$0xff]
    %v125 = vld [vmem:[#allocation2 + $0x208] sm:$0xff]
    %v126 = vld [vmem:[#allocation2 + $0x210] sm:$0xff]
    %v127 = vld [vmem:[#allocation2 + $0x218] sm:$0xff]
    %v128 = vld [vmem:[#allocation2 + $0x220] sm:$0xff]
    %v129 = vld [vmem:[#allocation2 + $0x228] sm:$0xff]
    %v130 = vld [vmem:[#allocation2 + $0x230] sm:$0xff]
    %v131 = vld [vmem:[#allocation2 + $0x238] sm:$0xff]
    %v132 = vld [vmem:[#allocation2 + $0x240] sm:$0xff]
    %v133 = vld [vmem:[#allocation2 + $0x248] sm:$0xff]
    %v134 = vld [vmem:[#allocation2 + $0x250] sm:$0xff]
    %v135 = vld [vmem:[#allocation2 + $0x258] sm:$0xff]
    %v136 = vld [vmem:[#allocation2 + $0x260] sm:$0xff]
    %v137 = vld [vmem:[#allocation2 + $0x268] sm:$0xff]
    %v138 = vld [vmem:[#allocation2 + $0x270] sm:$0xff]
    %v139 = vld [vmem:[#allocation2 + $0x278] sm:$0xff]
    %v140 = vld [vmem:[#allocation2 + $0x280] sm:$0xff]
    %v141 = vld [vmem:[#allocation2 + $0x288] sm:$0xff]
    %v142 = vld [vmem:[#allocation2 + $0x290] sm:$0xff]
    %v143 = vld [vmem:[#allocation2 + $0x298] sm:$0xff]
    %v144 = vld [vmem:[#allocation2 + $0x2a0] sm:$0xff]
    %v145 = vld [vmem:[#allocation2 + $0x2a8] sm:$0xff]
    %v146 = vld [vmem:[#allocation2 + $0x2b0] sm:$0xff]
    %v147 = vld [vmem:[#allocation2 + $0x2b8] sm:$0xff]
    %v148 = vld [vmem:[#allocation2 + $0x2c0] sm:$0xff]
    %v149 = vld [vmem:[#allocation2 + $0x2c8] sm:$0xff]
    %v150 = vld [vmem:[#allocation2 + $0x2d0] sm:$0xff]
    %v151 = vld [vmem:[#allocation2 + $0x2d8] sm:$0xff]
    %v152 = vld [vmem:[#allocation2 + $0x2e0] sm:$0xff]
    %v153 = vld [vmem:[#allocation2 + $0x2e8] sm:$0xff]
    %v154 = vld [vmem:[#allocation2 + $0x2f0] sm:$0xff]
    %v155 = vld [vmem:[#allocation2 + $0x2f8] sm:$0xff]
    %v156 = vld [vmem:[#allocation2 + $0x300] sm:$0xff]
    %v157 = vld [vmem:[#allocation2 + $0x308] sm:$0xff]
    %v158 = vld [vmem:[#allocation2 + $0x310] sm:$0xff]
    %v159 = vld [vmem:[#allocation2 + $0x318] sm:$0xff]
    %v160 = vld [vmem:[#allocation2 + $0x320] sm:$0xff]
    %v161 = vld [vmem:[#allocation2 + $0x328] sm:$0xff]
    %v162 = vld [vmem:[#allocation2 + $0x330] sm:$0xff]
    %v163 = vld [vmem:[#allocation2 + $0x338] sm:$0xff]
    %v164 = vld [vmem:[#allocation2 + $0x340] sm:$0xff]
    %v165 = vld [vmem:[#allocation2 + $0x348] sm:$0xff]
    %v166 = vld [vmem:[#allocation2 + $0x350] sm:$0xff]
    %v167 = vld [vmem:[#allocation2 + $0x358] sm:$0xff]
    %v168 = vld [vmem:[#allocation2 + $0x360] sm:$0xff]
    %v169 = vld [vmem:[#allocation2 + $0x368] sm:$0xff]
    %v170 = vld [vmem:[#allocation2 + $0x370] sm:$0xff]
    %v171 = vld [vmem:[#allocation2 + $0x378] sm:$0xff]
    %v172 = vld [vmem:[#allocation2 + $0x380] sm:$0xff]
    %v173 = vld [vmem:[#allocation2 + $0x388] sm:$0xff]
    %v174 = vld [vmem:[#allocation2 + $0x390] sm:$0xff]
    %v175 = vld [vmem:[#allocation2 + $0x398] sm:$0xff]
    %v176 = vld [vmem:[#allocation2 + $0x3a0] sm:$0xff]
    %v177 = vld [vmem:[#allocation2 + $0x3a8] sm:$0xff]
    %v178 = vld [vmem:[#allocation2 + $0x3b0] sm:$0xff]
    %v179 = vld [vmem:[#allocation2 + $0x3b8] sm:$0xff]
    %v180 = vld [vmem:[#allocation2 + $0x3c0] sm:$0xff]
    %v181 = vld [vmem:[#allocation2 + $0x3c8] sm:$0xff]
    %v182 = vld [vmem:[#allocation2 + $0x3d0] sm:$0xff]
    %v183 = vld [vmem:[#allocation2 + $0x3d8] sm:$0xff]
    %v184 = vld [vmem:[#allocation2 + $0x3e0] sm:$0xff]
    %v185 = vld [vmem:[#allocation2 + $0x3e8] sm:$0xff]
    %v186 = vld [vmem:[#allocation2 + $0x3f0] sm:$0xff]
    %v187 = vld [vmem:[#allocation2 + $0x3f8] sm:$0xff]
    %v188 = vld [vmem:[%s2] sm:$0xff]
    %v190 = vlaneseq
    %v191 = vshrl.u32 %v190, 7
    %v192 = vsub.s32 0, %v191
    %v193 = vrot.slane %v188, %v192
    %v194 = vlaneseq
    %v195 = vshrl.u32 %v194, 7
    %v196 = vsub.s32 1, %v195
    %v197 = vrot.slane %v188, %v196
    %v198 = vlaneseq
    %v199 = vshrl.u32 %v198, 7
    %v200 = vsub.s32 2, %v199
    %v201 = vrot.slane %v188, %v200
    %v202 = vlaneseq
    %v203 = vshrl.u32 %v202, 7
    %v204 = vsub.s32 3, %v203
    %v205 = vrot.slane %v188, %v204
    %v206 = vlaneseq
    %v207 = vshrl.u32 %v206, 7
    %v208 = vsub.s32 4, %v207
    %v209 = vrot.slane %v188, %v208
    %v210 = vlaneseq
    %v211 = vshrl.u32 %v210, 7
    %v212 = vsub.s32 5, %v211
    %v213 = vrot.slane %v188, %v212
    %v214 = vlaneseq
    %v215 = vshrl.u32 %v214, 7
    %v216 = vsub.s32 6, %v215
    %v217 = vrot.slane %v188, %v216
    %v218 = vlaneseq
    %v219 = vshrl.u32 %v218, 7
    %v220 = vsub.s32 7, %v219
    %v221 = vrot.slane %v188, %v220
    %v358 = vunpack.c.l.b16 %v60
    %v359 = vunpack.c.h.b16 %v60
    %v360 = vunpack.c.l.b16 %v61
    %v361 = vunpack.c.h.b16 %v61
    %v362 = vunpack.c.l.b16 %v62
    %v363 = vunpack.c.h.b16 %v62
    %v364 = vunpack.c.l.b16 %v63
    %v365 = vunpack.c.h.b16 %v63
    %v366 = vunpack.c.l.b16 %v64
    %v367 = vunpack.c.h.b16 %v64
    %v368 = vunpack.c.l.b16 %v65
    %v369 = vunpack.c.h.b16 %v65
    %v370 = vunpack.c.l.b16 %v66
    %v371 = vunpack.c.h.b16 %v66
    %v372 = vunpack.c.l.b16 %v67
    %v373 = vunpack.c.h.b16 %v67
    %v374 = vunpack.c.l.b16 %v68
    %v375 = vunpack.c.h.b16 %v68
    %v376 = vunpack.c.l.b16 %v69
    %v377 = vunpack.c.h.b16 %v69
    %v378 = vunpack.c.l.b16 %v70
    %v379 = vunpack.c.h.b16 %v70
    %v380 = vunpack.c.l.b16 %v71
    %v381 = vunpack.c.h.b16 %v71
    %v382 = vunpack.c.l.b16 %v72
    %v383 = vunpack.c.h.b16 %v72
    %v384 = vunpack.c.l.b16 %v73
    %v385 = vunpack.c.h.b16 %v73
    %v386 = vunpack.c.l.b16 %v74
    %v387 = vunpack.c.h.b16 %v74
    %v388 = vunpack.c.l.b16 %v75
    %v389 = vunpack.c.h.b16 %v75
    %v390 = vunpack.c.l.b16 %v76
    %v391 = vunpack.c.h.b16 %v76
    %v392 = vunpack.c.l.b16 %v77
    %v393 = vunpack.c.h.b16 %v77
    %v394 = vunpack.c.l.b16 %v78
    %v395 = vunpack.c.h.b16 %v78
    %v396 = vunpack.c.l.b16 %v79
    %v397 = vunpack.c.h.b16 %v79
    %v398 = vunpack.c.l.b16 %v80
    %v399 = vunpack.c.h.b16 %v80
    %v400 = vunpack.c.l.b16 %v81
    %v401 = vunpack.c.h.b16 %v81
    %v402 = vunpack.c.l.b16 %v82
    %v403 = vunpack.c.h.b16 %v82
    %v404 = vunpack.c.l.b16 %v83
    %v405 = vunpack.c.h.b16 %v83
    %v406 = vunpack.c.l.b16 %v84
    %v407 = vunpack.c.h.b16 %v84
    %v408 = vunpack.c.l.b16 %v85
    %v409 = vunpack.c.h.b16 %v85
    %v410 = vunpack.c.l.b16 %v86
    %v411 = vunpack.c.h.b16 %v86
    %v412 = vunpack.c.l.b16 %v87
    %v413 = vunpack.c.h.b16 %v87
    %v414 = vunpack.c.l.b16 %v88
    %v415 = vunpack.c.h.b16 %v88
    %v416 = vunpack.c.l.b16 %v89
    %v417 = vunpack.c.h.b16 %v89
    %v418 = vunpack.c.l.b16 %v90
    %v419 = vunpack.c.h.b16 %v90
    %v420 = vunpack.c.l.b16 %v91
    %v421 = vunpack.c.h.b16 %v91
    %v422 = vunpack.c.l.b16 %v92
    %v423 = vunpack.c.h.b16 %v92
    %v424 = vunpack.c.l.b16 %v93
    %v425 = vunpack.c.h.b16 %v93
    %v426 = vunpack.c.l.b16 %v94
    %v427 = vunpack.c.h.b16 %v94
    %v428 = vunpack.c.l.b16 %v95
    %v429 = vunpack.c.h.b16 %v95
    %v430 = vunpack.c.l.b16 %v96
    %v431 = vunpack.c.h.b16 %v96
    %v432 = vunpack.c.l.b16 %v97
    %v433 = vunpack.c.h.b16 %v97
    %v434 = vunpack.c.l.b16 %v98
    %v435 = vunpack.c.h.b16 %v98
    %v436 = vunpack.c.l.b16 %v99
    %v437 = vunpack.c.h.b16 %v99
    %v438 = vunpack.c.l.b16 %v100
    %v439 = vunpack.c.h.b16 %v100
    %v440 = vunpack.c.l.b16 %v101
    %v441 = vunpack.c.h.b16 %v101
    %v442 = vunpack.c.l.b16 %v102
    %v443 = vunpack.c.h.b16 %v102
    %v444 = vunpack.c.l.b16 %v103
    %v445 = vunpack.c.h.b16 %v103
    %v446 = vunpack.c.l.b16 %v104
    %v447 = vunpack.c.h.b16 %v104
    %v448 = vunpack.c.l.b16 %v105
    %v449 = vunpack.c.h.b16 %v105
    %v450 = vunpack.c.l.b16 %v106
    %v451 = vunpack.c.h.b16 %v106
    %v452 = vunpack.c.l.b16 %v107
    %v453 = vunpack.c.h.b16 %v107
    %v454 = vunpack.c.l.b16 %v108
    %v455 = vunpack.c.h.b16 %v108
    %v456 = vunpack.c.l.b16 %v109
    %v457 = vunpack.c.h.b16 %v109
    %v458 = vunpack.c.l.b16 %v110
    %v459 = vunpack.c.h.b16 %v110
    %v460 = vunpack.c.l.b16 %v111
    %v461 = vunpack.c.h.b16 %v111
    %v462 = vunpack.c.l.b16 %v112
    %v463 = vunpack.c.h.b16 %v112
    %v464 = vunpack.c.l.b16 %v113
    %v465 = vunpack.c.h.b16 %v113
    %v466 = vunpack.c.l.b16 %v114
    %v467 = vunpack.c.h.b16 %v114
    %v468 = vunpack.c.l.b16 %v115
    %v469 = vunpack.c.h.b16 %v115
    %v470 = vunpack.c.l.b16 %v116
    %v471 = vunpack.c.h.b16 %v116
    %v472 = vunpack.c.l.b16 %v117
    %v473 = vunpack.c.h.b16 %v117
    %v474 = vunpack.c.l.b16 %v118
    %v475 = vunpack.c.h.b16 %v118
    %v476 = vunpack.c.l.b16 %v119
    %v477 = vunpack.c.h.b16 %v119
    %v478 = vunpack.c.l.b16 %v120
    %v479 = vunpack.c.h.b16 %v120
    %v480 = vunpack.c.l.b16 %v121
    %v481 = vunpack.c.h.b16 %v121
    %v482 = vunpack.c.l.b16 %v122
    %v483 = vunpack.c.h.b16 %v122
    %v484 = vunpack.c.l.b16 %v123
    %v485 = vunpack.c.h.b16 %v123
    %v486 = vunpack.c.l.b16 %v124
    %v487 = vunpack.c.h.b16 %v124
    %v488 = vunpack.c.l.b16 %v125
    %v489 = vunpack.c.h.b16 %v125
    %v490 = vunpack.c.l.b16 %v126
    %v491 = vunpack.c.h.b16 %v126
    %v492 = vunpack.c.l.b16 %v127
    %v493 = vunpack.c.h.b16 %v127
    %v494 = vunpack.c.l.b16 %v128
    %v495 = vunpack.c.h.b16 %v128
    %v496 = vunpack.c.l.b16 %v129
    %v497 = vunpack.c.h.b16 %v129
    %v498 = vunpack.c.l.b16 %v130
    %v499 = vunpack.c.h.b16 %v130
    %v500 = vunpack.c.l.b16 %v131
    %v501 = vunpack.c.h.b16 %v131
    %v502 = vunpack.c.l.b16 %v132
    %v503 = vunpack.c.h.b16 %v132
    %v504 = vunpack.c.l.b16 %v133
    %v505 = vunpack.c.h.b16 %v133
    %v506 = vunpack.c.l.b16 %v134
    %v507 = vunpack.c.h.b16 %v134
    %v508 = vunpack.c.l.b16 %v135
    %v509 = vunpack.c.h.b16 %v135
    %v510 = vunpack.c.l.b16 %v136
    %v511 = vunpack.c.h.b16 %v136
    %v512 = vunpack.c.l.b16 %v137
    %v513 = vunpack.c.h.b16 %v137
    %v514 = vunpack.c.l.b16 %v138
    %v515 = vunpack.c.h.b16 %v138
    %v516 = vunpack.c.l.b16 %v139
    %v517 = vunpack.c.h.b16 %v139
    %v518 = vunpack.c.l.b16 %v140
    %v519 = vunpack.c.h.b16 %v140
    %v520 = vunpack.c.l.b16 %v141
    %v521 = vunpack.c.h.b16 %v141
    %v522 = vunpack.c.l.b16 %v142
    %v523 = vunpack.c.h.b16 %v142
    %v524 = vunpack.c.l.b16 %v143
    %v525 = vunpack.c.h.b16 %v143
    %v526 = vunpack.c.l.b16 %v144
    %v527 = vunpack.c.h.b16 %v144
    %v528 = vunpack.c.l.b16 %v145
    %v529 = vunpack.c.h.b16 %v145
    %v530 = vunpack.c.l.b16 %v146
    %v531 = vunpack.c.h.b16 %v146
    %v532 = vunpack.c.l.b16 %v147
    %v533 = vunpack.c.h.b16 %v147
    %v534 = vunpack.c.l.b16 %v148
    %v535 = vunpack.c.h.b16 %v148
    %v536 = vunpack.c.l.b16 %v149
    %v537 = vunpack.c.h.b16 %v149
    %v538 = vunpack.c.l.b16 %v150
    %v539 = vunpack.c.h.b16 %v150
    %v540 = vunpack.c.l.b16 %v151
    %v541 = vunpack.c.h.b16 %v151
    %v542 = vunpack.c.l.b16 %v152
    %v543 = vunpack.c.h.b16 %v152
    %v544 = vunpack.c.l.b16 %v153
    %v545 = vunpack.c.h.b16 %v153
    %v546 = vunpack.c.l.b16 %v154
    %v547 = vunpack.c.h.b16 %v154
    %v548 = vunpack.c.l.b16 %v155
    %v549 = vunpack.c.h.b16 %v155
    %v550 = vunpack.c.l.b16 %v156
    %v551 = vunpack.c.h.b16 %v156
    %v552 = vunpack.c.l.b16 %v157
    %v553 = vunpack.c.h.b16 %v157
    %v554 = vunpack.c.l.b16 %v158
    %v555 = vunpack.c.h.b16 %v158
    %v556 = vunpack.c.l.b16 %v159
    %v557 = vunpack.c.h.b16 %v159
    %v558 = vunpack.c.l.b16 %v160
    %v559 = vunpack.c.h.b16 %v160
    %v560 = vunpack.c.l.b16 %v161
    %v561 = vunpack.c.h.b16 %v161
    %v562 = vunpack.c.l.b16 %v162
    %v563 = vunpack.c.h.b16 %v162
    %v564 = vunpack.c.l.b16 %v163
    %v565 = vunpack.c.h.b16 %v163
    %v566 = vunpack.c.l.b16 %v164
    %v567 = vunpack.c.h.b16 %v164
    %v568 = vunpack.c.l.b16 %v165
    %v569 = vunpack.c.h.b16 %v165
    %v570 = vunpack.c.l.b16 %v166
    %v571 = vunpack.c.h.b16 %v166
    %v572 = vunpack.c.l.b16 %v167
    %v573 = vunpack.c.h.b16 %v167
    %v574 = vunpack.c.l.b16 %v168
    %v575 = vunpack.c.h.b16 %v168
    %v576 = vunpack.c.l.b16 %v169
    %v577 = vunpack.c.h.b16 %v169
    %v578 = vunpack.c.l.b16 %v170
    %v579 = vunpack.c.h.b16 %v170
    %v580 = vunpack.c.l.b16 %v171
    %v581 = vunpack.c.h.b16 %v171
    %v582 = vunpack.c.l.b16 %v172
    %v583 = vunpack.c.h.b16 %v172
    %v584 = vunpack.c.l.b16 %v173
    %v585 = vunpack.c.h.b16 %v173
    %v586 = vunpack.c.l.b16 %v174
    %v587 = vunpack.c.h.b16 %v174
    %v588 = vunpack.c.l.b16 %v175
    %v589 = vunpack.c.h.b16 %v175
    %v590 = vunpack.c.l.b16 %v176
    %v591 = vunpack.c.h.b16 %v176
    %v592 = vunpack.c.l.b16 %v177
    %v593 = vunpack.c.h.b16 %v177
    %v594 = vunpack.c.l.b16 %v178
    %v595 = vunpack.c.h.b16 %v178
    %v596 = vunpack.c.l.b16 %v179
    %v597 = vunpack.c.h.b16 %v179
    %v598 = vunpack.c.l.b16 %v180
    %v599 = vunpack.c.h.b16 %v180
    %v600 = vunpack.c.l.b16 %v181
    %v601 = vunpack.c.h.b16 %v181
    %v602 = vunpack.c.l.b16 %v182
    %v603 = vunpack.c.h.b16 %v182
    %v604 = vunpack.c.l.b16 %v183
    %v605 = vunpack.c.h.b16 %v183
    %v606 = vunpack.c.l.b16 %v184
    %v607 = vunpack.c.h.b16 %v184
    %v608 = vunpack.c.l.b16 %v185
    %v609 = vunpack.c.h.b16 %v185
    %v610 = vunpack.c.l.b16 %v186
    %v611 = vunpack.c.h.b16 %v186
    %v612 = vunpack.c.l.b16 %v187
    %v613 = vunpack.c.h.b16 %v187
    %v614 = vpack.c.b16 %v366, %v358
    %v615 = vpack.c.b16 %v367, %v359
    %v616 = vpack.c.b16 %v368, %v360
    %v617 = vpack.c.b16 %v369, %v361
    %v618 = vpack.c.b16 %v370, %v362
    %v619 = vpack.c.b16 %v371, %v363
    %v620 = vpack.c.b16 %v372, %v364
    %v621 = vpack.c.b16 %v373, %v365
    %v622 = vpack.c.b16 %v382, %v374
    %v623 = vpack.c.b16 %v383, %v375
    %v624 = vpack.c.b16 %v384, %v376
    %v625 = vpack.c.b16 %v385, %v377
    %v626 = vpack.c.b16 %v386, %v378
    %v627 = vpack.c.b16 %v387, %v379
    %v628 = vpack.c.b16 %v388, %v380
    %v629 = vpack.c.b16 %v389, %v381
    %v630 = vpack.c.b16 %v398, %v390
    %v631 = vpack.c.b16 %v399, %v391
    %v632 = vpack.c.b16 %v400, %v392
    %v633 = vpack.c.b16 %v401, %v393
    %v634 = vpack.c.b16 %v402, %v394
    %v635 = vpack.c.b16 %v403, %v395
    %v636 = vpack.c.b16 %v404, %v396
    %v637 = vpack.c.b16 %v405, %v397
    %v638 = vpack.c.b16 %v414, %v406
    %v639 = vpack.c.b16 %v415, %v407
    %v640 = vpack.c.b16 %v416, %v408
    %v641 = vpack.c.b16 %v417, %v409
    %v642 = vpack.c.b16 %v418, %v410
    %v643 = vpack.c.b16 %v419, %v411
    %v644 = vpack.c.b16 %v420, %v412
    %v645 = vpack.c.b16 %v421, %v413
    %v646 = vpack.c.b16 %v430, %v422
    %v647 = vpack.c.b16 %v431, %v423
    %v648 = vpack.c.b16 %v432, %v424
    %v649 = vpack.c.b16 %v433, %v425
    %v650 = vpack.c.b16 %v434, %v426
    %v651 = vpack.c.b16 %v435, %v427
    %v652 = vpack.c.b16 %v436, %v428
    %v653 = vpack.c.b16 %v437, %v429
    %v654 = vpack.c.b16 %v446, %v438
    %v655 = vpack.c.b16 %v447, %v439
    %v656 = vpack.c.b16 %v448, %v440
    %v657 = vpack.c.b16 %v449, %v441
    %v658 = vpack.c.b16 %v450, %v442
    %v659 = vpack.c.b16 %v451, %v443
    %v660 = vpack.c.b16 %v452, %v444
    %v661 = vpack.c.b16 %v453, %v445
    %v662 = vpack.c.b16 %v462, %v454
    %v663 = vpack.c.b16 %v463, %v455
    %v664 = vpack.c.b16 %v464, %v456
    %v665 = vpack.c.b16 %v465, %v457
    %v666 = vpack.c.b16 %v466, %v458
    %v667 = vpack.c.b16 %v467, %v459
    %v668 = vpack.c.b16 %v468, %v460
    %v669 = vpack.c.b16 %v469, %v461
    %v670 = vpack.c.b16 %v478, %v470
    %v671 = vpack.c.b16 %v479, %v471
    %v672 = vpack.c.b16 %v480, %v472
    %v673 = vpack.c.b16 %v481, %v473
    %v674 = vpack.c.b16 %v482, %v474
    %v675 = vpack.c.b16 %v483, %v475
    %v676 = vpack.c.b16 %v484, %v476
    %v677 = vpack.c.b16 %v485, %v477
    %v678 = vpack.c.b16 %v494, %v486
    %v679 = vpack.c.b16 %v495, %v487
    %v680 = vpack.c.b16 %v496, %v488
    %v681 = vpack.c.b16 %v497, %v489
    %v682 = vpack.c.b16 %v498, %v490
    %v683 = vpack.c.b16 %v499, %v491
    %v684 = vpack.c.b16 %v500, %v492
    %v685 = vpack.c.b16 %v501, %v493
    %v686 = vpack.c.b16 %v510, %v502
    %v687 = vpack.c.b16 %v511, %v503
    %v688 = vpack.c.b16 %v512, %v504
    %v689 = vpack.c.b16 %v513, %v505
    %v690 = vpack.c.b16 %v514, %v506
    %v691 = vpack.c.b16 %v515, %v507
    %v692 = vpack.c.b16 %v516, %v508
    %v693 = vpack.c.b16 %v517, %v509
    %v694 = vpack.c.b16 %v526, %v518
    %v695 = vpack.c.b16 %v527, %v519
    %v696 = vpack.c.b16 %v528, %v520
    %v697 = vpack.c.b16 %v529, %v521
    %v698 = vpack.c.b16 %v530, %v522
    %v699 = vpack.c.b16 %v531, %v523
    %v700 = vpack.c.b16 %v532, %v524
    %v701 = vpack.c.b16 %v533, %v525
    %v702 = vpack.c.b16 %v542, %v534
    %v703 = vpack.c.b16 %v543, %v535
    %v704 = vpack.c.b16 %v544, %v536
    %v705 = vpack.c.b16 %v545, %v537
    %v706 = vpack.c.b16 %v546, %v538
    %v707 = vpack.c.b16 %v547, %v539
    %v708 = vpack.c.b16 %v548, %v540
    %v709 = vpack.c.b16 %v549, %v541
    %v710 = vpack.c.b16 %v558, %v550
    %v711 = vpack.c.b16 %v559, %v551
    %v712 = vpack.c.b16 %v560, %v552
    %v713 = vpack.c.b16 %v561, %v553
    %v714 = vpack.c.b16 %v562, %v554
    %v715 = vpack.c.b16 %v563, %v555
    %v716 = vpack.c.b16 %v564, %v556
    %v717 = vpack.c.b16 %v565, %v557
    %v718 = vpack.c.b16 %v574, %v566
    %v719 = vpack.c.b16 %v575, %v567
    %v720 = vpack.c.b16 %v576, %v568
    %v721 = vpack.c.b16 %v577, %v569
    %v722 = vpack.c.b16 %v578, %v570
    %v723 = vpack.c.b16 %v579, %v571
    %v724 = vpack.c.b16 %v580, %v572
    %v725 = vpack.c.b16 %v581, %v573
    %v726 = vpack.c.b16 %v590, %v582
    %v727 = vpack.c.b16 %v591, %v583
    %v728 = vpack.c.b16 %v592, %v584
    %v729 = vpack.c.b16 %v593, %v585
    %v730 = vpack.c.b16 %v594, %v586
    %v731 = vpack.c.b16 %v595, %v587
    %v732 = vpack.c.b16 %v596, %v588
    %v733 = vpack.c.b16 %v597, %v589
    %v734 = vpack.c.b16 %v606, %v598
    %v735 = vpack.c.b16 %v607, %v599
    %v736 = vpack.c.b16 %v608, %v600
    %v737 = vpack.c.b16 %v609, %v601
    %v738 = vpack.c.b16 %v610, %v602
    %v739 = vpack.c.b16 %v611, %v603
    %v740 = vpack.c.b16 %v612, %v604
    %v741 = vpack.c.b16 %v613, %v605
    %870 = vmatprep.subr.bf16.mxu0 %v671
    %871 = vmatpush1.bf16.msra.mxu0 %v670
    %872 = vmatprep.subr.bf16.mxu0 %v663
    %873 = vmatpush1.bf16.msra.mxu0 %v662
    %874 = vmatprep.subr.bf16.mxu0 %v655
    %875 = vmatpush1.bf16.msra.mxu0 %v654
    %876 = vmatprep.subr.bf16.mxu0 %v647
    %877 = vmatpush1.bf16.msra.mxu0 %v646
    %878 = vmatprep.subr.bf16.mxu0 %v639
    %879 = vmatpush1.bf16.msra.mxu0 %v638
    %880 = vmatprep.subr.bf16.mxu0 %v631
    %881 = vmatpush1.bf16.msra.mxu0 %v630
    %882 = vmatprep.subr.bf16.mxu0 %v623
    %883 = vmatpush1.bf16.msra.mxu0 %v622
    %884 = vmatprep.subr.bf16.mxu0 %v615
    %885 = vmatpush1.bf16.msra.mxu0 %v614
    %886 = vmatprep.subr.bf16.mxu0 %v735
    %887 = vmatpush2.bf16.msra.mxu0 %v734
    %888 = vmatprep.subr.bf16.mxu0 %v727
    %889 = vmatpush2.bf16.msra.mxu0 %v726
    %890 = vmatprep.subr.bf16.mxu0 %v719
    %891 = vmatpush2.bf16.msra.mxu0 %v718
    %892 = vmatprep.subr.bf16.mxu0 %v711
    %893 = vmatpush2.bf16.msra.mxu0 %v710
    %894 = vmatprep.subr.bf16.mxu0 %v703
    %895 = vmatpush2.bf16.msra.mxu0 %v702
    %896 = vmatprep.subr.bf16.mxu0 %v695
    %897 = vmatpush2.bf16.msra.mxu0 %v694
    %898 = vmatprep.subr.bf16.mxu0 %v687
    %899 = vmatpush2.bf16.msra.mxu0 %v686
    %900 = vmatprep.subr.bf16.mxu0 %v679
    %901 = vmatpush2.bf16.msra.mxu0 %v678
    %902 = vmatprep.mubr.bf16.mxu0 %v59
    %903 = vmatmul.mubr.bf16.gmra.mxu0 %v58
    %v904 = vpop.f32.mrf.mxu0
    %v905 = vadd.f32 %v193, %v904
    %v906 = vpop.f32.mrf.mxu0
    %v907 = vadd.f32 %v197, %v906
    %v908 = vpop.f32.mrf.mxu0
    %v909 = vpop.f32.mrf.mxu0
    %910 = vdwg.mxu0
    %911 = vmatprep.subr.bf16.mxu0 %v673
    %912 = vmatpush1.bf16.msra.mxu0 %v672
    %913 = vmatprep.subr.bf16.mxu0 %v665
    %914 = vmatpush1.bf16.msra.mxu0 %v664
    %915 = vmatprep.subr.bf16.mxu0 %v657
    %916 = vmatpush1.bf16.msra.mxu0 %v656
    %917 = vmatprep.subr.bf16.mxu0 %v649
    %918 = vmatpush1.bf16.msra.mxu0 %v648
    %919 = vmatprep.subr.bf16.mxu0 %v641
    %920 = vmatpush1.bf16.msra.mxu0 %v640
    %921 = vmatprep.subr.bf16.mxu0 %v633
    %922 = vmatpush1.bf16.msra.mxu0 %v632
    %923 = vmatprep.subr.bf16.mxu0 %v625
    %924 = vmatpush1.bf16.msra.mxu0 %v624
    %925 = vmatprep.subr.bf16.mxu0 %v617
    %926 = vmatpush1.bf16.msra.mxu0 %v616
    %927 = vmatprep.subr.bf16.mxu0 %v737
    %928 = vmatpush2.bf16.msra.mxu0 %v736
    %929 = vmatprep.subr.bf16.mxu0 %v729
    %930 = vmatpush2.bf16.msra.mxu0 %v728
    %931 = vmatprep.subr.bf16.mxu0 %v721
    %932 = vmatpush2.bf16.msra.mxu0 %v720
    %933 = vmatprep.subr.bf16.mxu0 %v713
    %934 = vmatpush2.bf16.msra.mxu0 %v712
    %935 = vmatprep.subr.bf16.mxu0 %v705
    %936 = vmatpush2.bf16.msra.mxu0 %v704
    %937 = vmatprep.subr.bf16.mxu0 %v697
    %938 = vmatpush2.bf16.msra.mxu0 %v696
    %939 = vmatprep.subr.bf16.mxu0 %v689
    %940 = vmatpush2.bf16.msra.mxu0 %v688
    %941 = vmatprep.subr.bf16.mxu0 %v681
    %942 = vmatpush2.bf16.msra.mxu0 %v680
    %943 = vmatprep.mubr.bf16.mxu0 %v59
    %944 = vmatmul.mubr.bf16.gmra.mxu0 %v58
    %v945 = vpop.f32.mrf.mxu0
    %v946 = vadd.f32 %v201, %v945
    %v947 = vpop.f32.mrf.mxu0
    %v948 = vadd.f32 %v205, %v947
    %v949 = vpop.f32.mrf.mxu0
    %v950 = vpop.f32.mrf.mxu0
    %951 = vdwg.mxu0
    %952 = vmatprep.subr.bf16.mxu0 %v675
    %953 = vmatpush1.bf16.msra.mxu0 %v674
    %954 = vmatprep.subr.bf16.mxu0 %v667
    %955 = vmatpush1.bf16.msra.mxu0 %v666
    %956 = vmatprep.subr.bf16.mxu0 %v659
    %957 = vmatpush1.bf16.msra.mxu0 %v658
    %958 = vmatprep.subr.bf16.mxu0 %v651
    %959 = vmatpush1.bf16.msra.mxu0 %v650
    %960 = vmatprep.subr.bf16.mxu0 %v643
    %961 = vmatpush1.bf16.msra.mxu0 %v642
    %962 = vmatprep.subr.bf16.mxu0 %v635
    %963 = vmatpush1.bf16.msra.mxu0 %v634
    %964 = vmatprep.subr.bf16.mxu0 %v627
    %965 = vmatpush1.bf16.msra.mxu0 %v626
    %966 = vmatprep.subr.bf16.mxu0 %v619
    %967 = vmatpush1.bf16.msra.mxu0 %v618
    %968 = vmatprep.subr.bf16.mxu0 %v739
    %969 = vmatpush2.bf16.msra.mxu0 %v738
    %970 = vmatprep.subr.bf16.mxu0 %v731
    %971 = vmatpush2.bf16.msra.mxu0 %v730
    %972 = vmatprep.subr.bf16.mxu0 %v723
    %973 = vmatpush2.bf16.msra.mxu0 %v722
    %974 = vmatprep.subr.bf16.mxu0 %v715
    %975 = vmatpush2.bf16.msra.mxu0 %v714
    %976 = vmatprep.subr.bf16.mxu0 %v707
    %977 = vmatpush2.bf16.msra.mxu0 %v706
    %978 = vmatprep.subr.bf16.mxu0 %v699
    %979 = vmatpush2.bf16.msra.mxu0 %v698
    %980 = vmatprep.subr.bf16.mxu0 %v691
    %981 = vmatpush2.bf16.msra.mxu0 %v690
    %982 = vmatprep.subr.bf16.mxu0 %v683
    %983 = vmatpush2.bf16.msra.mxu0 %v682
    %984 = vmatprep.mubr.bf16.mxu0 %v59
    %985 = vmatmul.mubr.bf16.gmra.mxu0 %v58
    %v986 = vpop.f32.mrf.mxu0
    %v987 = vadd.f32 %v209, %v986
    %v988 = vpop.f32.mrf.mxu0
    %v989 = vadd.f32 %v213, %v988
    %v990 = vpop.f32.mrf.mxu0
    %v991 = vpop.f32.mrf.mxu0
    %992 = vdwg.mxu0
    %993 = vmatprep.subr.bf16.mxu0 %v677
    %994 = vmatpush1.bf16.msra.mxu0 %v676
    %995 = vmatprep.subr.bf16.mxu0 %v669
    %996 = vmatpush1.bf16.msra.mxu0 %v668
    %997 = vmatprep.subr.bf16.mxu0 %v661
    %998 = vmatpush1.bf16.msra.mxu0 %v660
    %999 = vmatprep.subr.bf16.mxu0 %v653
    %1000 = vmatpush1.bf16.msra.mxu0 %v652
    %1001 = vmatprep.subr.bf16.mxu0 %v645
    %1002 = vmatpush1.bf16.msra.mxu0 %v644
    %1003 = vmatprep.subr.bf16.mxu0 %v637
    %1004 = vmatpush1.bf16.msra.mxu0 %v636
    %1005 = vmatprep.subr.bf16.mxu0 %v629
    %1006 = vmatpush1.bf16.msra.mxu0 %v628
    %1007 = vmatprep.subr.bf16.mxu0 %v621
    %1008 = vmatpush1.bf16.msra.mxu0 %v620
    %1009 = vmatprep.subr.bf16.mxu0 %v741
    %1010 = vmatpush2.bf16.msra.mxu0 %v740
    %1011 = vmatprep.subr.bf16.mxu0 %v733
    %1012 = vmatpush2.bf16.msra.mxu0 %v732
    %1013 = vmatprep.subr.bf16.mxu0 %v725
    %1014 = vmatpush2.bf16.msra.mxu0 %v724
    %1015 = vmatprep.subr.bf16.mxu0 %v717
    %1016 = vmatpush2.bf16.msra.mxu0 %v716
    %1017 = vmatprep.subr.bf16.mxu0 %v709
    %1018 = vmatpush2.bf16.msra.mxu0 %v708
    %1019 = vmatprep.subr.bf16.mxu0 %v701
    %1020 = vmatpush2.bf16.msra.mxu0 %v700
    %1021 = vmatprep.subr.bf16.mxu0 %v693
    %1022 = vmatpush2.bf16.msra.mxu0 %v692
    %1023 = vmatprep.subr.bf16.mxu0 %v685
    %1024 = vmatpush2.bf16.msra.mxu0 %v684
    %1025 = vmatprep.mubr.bf16.mxu0 %v59
    %1026 = vmatmul.mubr.bf16.gmra.mxu0 %v58
    %v1027 = vpop.f32.mrf.mxu0
    %v1028 = vadd.f32 %v217, %v1027
    %v1029 = vpop.f32.mrf.mxu0
    %v1030 = vadd.f32 %v221, %v1029
    %v1031 = vpop.f32.mrf.mxu0
    %v1032 = vpop.f32.mrf.mxu0
    %1033 = vdwg.mxu0
    %v1034 = vmax.f32 %v905, 0.0
    %v1035 = vmax.f32 %v907, 0.0
    %v1036 = vmax.f32 %v946, 0.0
    %v1037 = vmax.f32 %v948, 0.0
    %v1038 = vmax.f32 %v987, 0.0
    %v1039 = vmax.f32 %v989, 0.0
    %v1040 = vmax.f32 %v1028, 0.0
    %v1041 = vmax.f32 %v1030, 0.0
    %v1042 = vpack.c.bf16 %v1034, %v1034
    %v1043 = vpack.c.bf16 %v1035, %v1035
    %v1044 = vpack.c.bf16 %v1036, %v1036
    %v1045 = vpack.c.bf16 %v1037, %v1037
    %v1046 = vpack.c.bf16 %v1038, %v1038
    %v1047 = vpack.c.bf16 %v1039, %v1039
    %v1048 = vpack.c.bf16 %v1040, %v1040
    %v1049 = vpack.c.bf16 %v1041, %v1041
    %v1050 = vld [vmem:[#allocation5] sm:$0xff]
    %v1051 = vld [vmem:[#allocation5 + $0x8] sm:$0xff]
    %v1052 = vld [vmem:[#allocation5 + $0x10] sm:$0xff]
    %v1053 = vld [vmem:[#allocation5 + $0x18] sm:$0xff]
    %v1054 = vld [vmem:[#allocation5 + $0x20] sm:$0xff]
    %v1055 = vld [vmem:[#allocation5 + $0x28] sm:$0xff]
    %v1056 = vld [vmem:[#allocation5 + $0x30] sm:$0xff]
    %v1057 = vld [vmem:[#allocation5 + $0x38] sm:$0xff]
    %v1058 = vld [vmem:[#allocation5 + $0x40] sm:$0xff]
    %v1059 = vld [vmem:[#allocation5 + $0x48] sm:$0xff]
    %v1060 = vld [vmem:[#allocation5 + $0x50] sm:$0xff]
    %v1061 = vld [vmem:[#allocation5 + $0x58] sm:$0xff]
    %v1062 = vld [vmem:[#allocation5 + $0x60] sm:$0xff]
    %v1063 = vld [vmem:[#allocation5 + $0x68] sm:$0xff]
    %v1064 = vld [vmem:[#allocation5 + $0x70] sm:$0xff]
    %v1065 = vld [vmem:[#allocation5 + $0x78] sm:$0xff]
    %v1066 = vld [vmem:[#allocation5 + $0x80] sm:$0xff]
    %v1067 = vld [vmem:[#allocation5 + $0x88] sm:$0xff]
    %v1068 = vld [vmem:[#allocation5 + $0x90] sm:$0xff]
    %v1069 = vld [vmem:[#allocation5 + $0x98] sm:$0xff]
    %v1070 = vld [vmem:[#allocation5 + $0xa0] sm:$0xff]
    %v1071 = vld [vmem:[#allocation5 + $0xa8] sm:$0xff]
    %v1072 = vld [vmem:[#allocation5 + $0xb0] sm:$0xff]
    %v1073 = vld [vmem:[#allocation5 + $0xb8] sm:$0xff]
    %v1074 = vld [vmem:[#allocation5 + $0xc0] sm:$0xff]
    %v1075 = vld [vmem:[#allocation5 + $0xc8] sm:$0xff]
    %v1076 = vld [vmem:[#allocation5 + $0xd0] sm:$0xff]
    %v1077 = vld [vmem:[#allocation5 + $0xd8] sm:$0xff]
    %v1078 = vld [vmem:[#allocation5 + $0xe0] sm:$0xff]
    %v1079 = vld [vmem:[#allocation5 + $0xe8] sm:$0xff]
    %v1080 = vld [vmem:[#allocation5 + $0xf0] sm:$0xff]
    %v1081 = vld [vmem:[#allocation5 + $0xf8] sm:$0xff]
    %v1082 = vld [vmem:[#allocation5 + $0x100] sm:$0xff]
    %v1083 = vld [vmem:[#allocation5 + $0x108] sm:$0xff]
    %v1084 = vld [vmem:[#allocation5 + $0x110] sm:$0xff]
    %v1085 = vld [vmem:[#allocation5 + $0x118] sm:$0xff]
    %v1086 = vld [vmem:[#allocation5 + $0x120] sm:$0xff]
    %v1087 = vld [vmem:[#allocation5 + $0x128] sm:$0xff]
    %v1088 = vld [vmem:[#allocation5 + $0x130] sm:$0xff]
    %v1089 = vld [vmem:[#allocation5 + $0x138] sm:$0xff]
    %v1090 = vld [vmem:[#allocation5 + $0x140] sm:$0xff]
    %v1091 = vld [vmem:[#allocation5 + $0x148] sm:$0xff]
    %v1092 = vld [vmem:[#allocation5 + $0x150] sm:$0xff]
    %v1093 = vld [vmem:[#allocation5 + $0x158] sm:$0xff]
    %v1094 = vld [vmem:[#allocation5 + $0x160] sm:$0xff]
    %v1095 = vld [vmem:[#allocation5 + $0x168] sm:$0xff]
    %v1096 = vld [vmem:[#allocation5 + $0x170] sm:$0xff]
    %v1097 = vld [vmem:[#allocation5 + $0x178] sm:$0xff]
    %v1098 = vld [vmem:[#allocation5 + $0x180] sm:$0xff]
    %v1099 = vld [vmem:[#allocation5 + $0x188] sm:$0xff]
    %v1100 = vld [vmem:[#allocation5 + $0x190] sm:$0xff]
    %v1101 = vld [vmem:[#allocation5 + $0x198] sm:$0xff]
    %v1102 = vld [vmem:[#allocation5 + $0x1a0] sm:$0xff]
    %v1103 = vld [vmem:[#allocation5 + $0x1a8] sm:$0xff]
    %v1104 = vld [vmem:[#allocation5 + $0x1b0] sm:$0xff]
    %v1105 = vld [vmem:[#allocation5 + $0x1b8] sm:$0xff]
    %v1106 = vld [vmem:[#allocation5 + $0x1c0] sm:$0xff]
    %v1107 = vld [vmem:[#allocation5 + $0x1c8] sm:$0xff]
    %v1108 = vld [vmem:[#allocation5 + $0x1d0] sm:$0xff]
    %v1109 = vld [vmem:[#allocation5 + $0x1d8] sm:$0xff]
    %v1110 = vld [vmem:[#allocation5 + $0x1e0] sm:$0xff]
    %v1111 = vld [vmem:[#allocation5 + $0x1e8] sm:$0xff]
    %v1112 = vld [vmem:[#allocation5 + $0x1f0] sm:$0xff]
    %v1113 = vld [vmem:[#allocation5 + $0x1f8] sm:$0xff]
    %v1114 = vld [vmem:[#allocation5 + $0x200] sm:$0xff]
    %v1115 = vld [vmem:[#allocation5 + $0x208] sm:$0xff]
    %v1116 = vld [vmem:[#allocation5 + $0x210] sm:$0xff]
    %v1117 = vld [vmem:[#allocation5 + $0x218] sm:$0xff]
    %v1118 = vld [vmem:[#allocation5 + $0x220] sm:$0xff]
    %v1119 = vld [vmem:[#allocation5 + $0x228] sm:$0xff]
    %v1120 = vld [vmem:[#allocation5 + $0x230] sm:$0xff]
    %v1121 = vld [vmem:[#allocation5 + $0x238] sm:$0xff]
    %v1122 = vld [vmem:[#allocation5 + $0x240] sm:$0xff]
    %v1123 = vld [vmem:[#allocation5 + $0x248] sm:$0xff]
    %v1124 = vld [vmem:[#allocation5 + $0x250] sm:$0xff]
    %v1125 = vld [vmem:[#allocation5 + $0x258] sm:$0xff]
    %v1126 = vld [vmem:[#allocation5 + $0x260] sm:$0xff]
    %v1127 = vld [vmem:[#allocation5 + $0x268] sm:$0xff]
    %v1128 = vld [vmem:[#allocation5 + $0x270] sm:$0xff]
    %v1129 = vld [vmem:[#allocation5 + $0x278] sm:$0xff]
    %v1130 = vld [vmem:[#allocation5 + $0x280] sm:$0xff]
    %v1131 = vld [vmem:[#allocation5 + $0x288] sm:$0xff]
    %v1132 = vld [vmem:[#allocation5 + $0x290] sm:$0xff]
    %v1133 = vld [vmem:[#allocation5 + $0x298] sm:$0xff]
    %v1134 = vld [vmem:[#allocation5 + $0x2a0] sm:$0xff]
    %v1135 = vld [vmem:[#allocation5 + $0x2a8] sm:$0xff]
    %v1136 = vld [vmem:[#allocation5 + $0x2b0] sm:$0xff]
    %v1137 = vld [vmem:[#allocation5 + $0x2b8] sm:$0xff]
    %v1138 = vld [vmem:[#allocation5 + $0x2c0] sm:$0xff]
    %v1139 = vld [vmem:[#allocation5 + $0x2c8] sm:$0xff]
    %v1140 = vld [vmem:[#allocation5 + $0x2d0] sm:$0xff]
    %v1141 = vld [vmem:[#allocation5 + $0x2d8] sm:$0xff]
    %v1142 = vld [vmem:[#allocation5 + $0x2e0] sm:$0xff]
    %v1143 = vld [vmem:[#allocation5 + $0x2e8] sm:$0xff]
    %v1144 = vld [vmem:[#allocation5 + $0x2f0] sm:$0xff]
    %v1145 = vld [vmem:[#allocation5 + $0x2f8] sm:$0xff]
    %v1146 = vld [vmem:[#allocation5 + $0x300] sm:$0xff]
    %v1147 = vld [vmem:[#allocation5 + $0x308] sm:$0xff]
    %v1148 = vld [vmem:[#allocation5 + $0x310] sm:$0xff]
    %v1149 = vld [vmem:[#allocation5 + $0x318] sm:$0xff]
    %v1150 = vld [vmem:[#allocation5 + $0x320] sm:$0xff]
    %v1151 = vld [vmem:[#allocation5 + $0x328] sm:$0xff]
    %v1152 = vld [vmem:[#allocation5 + $0x330] sm:$0xff]
    %v1153 = vld [vmem:[#allocation5 + $0x338] sm:$0xff]
    %v1154 = vld [vmem:[#allocation5 + $0x340] sm:$0xff]
    %v1155 = vld [vmem:[#allocation5 + $0x348] sm:$0xff]
    %v1156 = vld [vmem:[#allocation5 + $0x350] sm:$0xff]
    %v1157 = vld [vmem:[#allocation5 + $0x358] sm:$0xff]
    %v1158 = vld [vmem:[#allocation5 + $0x360] sm:$0xff]
    %v1159 = vld [vmem:[#allocation5 + $0x368] sm:$0xff]
    %v1160 = vld [vmem:[#allocation5 + $0x370] sm:$0xff]
    %v1161 = vld [vmem:[#allocation5 + $0x378] sm:$0xff]
    %v1162 = vld [vmem:[#allocation5 + $0x380] sm:$0xff]
    %v1163 = vld [vmem:[#allocation5 + $0x388] sm:$0xff]
    %v1164 = vld [vmem:[#allocation5 + $0x390] sm:$0xff]
    %v1165 = vld [vmem:[#allocation5 + $0x398] sm:$0xff]
    %v1166 = vld [vmem:[#allocation5 + $0x3a0] sm:$0xff]
    %v1167 = vld [vmem:[#allocation5 + $0x3a8] sm:$0xff]
    %v1168 = vld [vmem:[#allocation5 + $0x3b0] sm:$0xff]
    %v1169 = vld [vmem:[#allocation5 + $0x3b8] sm:$0xff]
    %v1170 = vld [vmem:[#allocation5 + $0x3c0] sm:$0xff]
    %v1171 = vld [vmem:[#allocation5 + $0x3c8] sm:$0xff]
    %v1172 = vld [vmem:[#allocation5 + $0x3d0] sm:$0xff]
    %v1173 = vld [vmem:[#allocation5 + $0x3d8] sm:$0xff]
    %v1174 = vld [vmem:[#allocation5 + $0x3e0] sm:$0xff]
    %v1175 = vld [vmem:[#allocation5 + $0x3e8] sm:$0xff]
    %v1176 = vld [vmem:[#allocation5 + $0x3f0] sm:$0xff]
    %v1177 = vld [vmem:[#allocation5 + $0x3f8] sm:$0xff]
    %v1178 = vld [vmem:[%s4] sm:$0x3]
    %v1180 = vlaneseq
    %v1181 = vshrl.u32 %v1180, 7
    %v1182 = vsub.s32 0, %v1181
    %v1183 = vrot.slane %v1178, %v1182
    %v1184 = vlaneseq
    %v1185 = vshrl.u32 %v1184, 7
    %v1186 = vsub.s32 1, %v1185
    %v1187 = vrot.slane %v1178, %v1186
    %v1318 = vunpack.c.l.b16 %v1050
    %v1319 = vunpack.c.h.b16 %v1050
    %v1320 = vunpack.c.l.b16 %v1051
    %v1321 = vunpack.c.h.b16 %v1051
    %v1322 = vunpack.c.l.b16 %v1052
    %v1323 = vunpack.c.h.b16 %v1052
    %v1324 = vunpack.c.l.b16 %v1053
    %v1325 = vunpack.c.h.b16 %v1053
    %v1326 = vunpack.c.l.b16 %v1054
    %v1327 = vunpack.c.h.b16 %v1054
    %v1328 = vunpack.c.l.b16 %v1055
    %v1329 = vunpack.c.h.b16 %v1055
    %v1330 = vunpack.c.l.b16 %v1056
    %v1331 = vunpack.c.h.b16 %v1056
    %v1332 = vunpack.c.l.b16 %v1057
    %v1333 = vunpack.c.h.b16 %v1057
    %v1334 = vunpack.c.l.b16 %v1058
    %v1335 = vunpack.c.h.b16 %v1058
    %v1336 = vunpack.c.l.b16 %v1059
    %v1337 = vunpack.c.h.b16 %v1059
    %v1338 = vunpack.c.l.b16 %v1060
    %v1339 = vunpack.c.h.b16 %v1060
    %v1340 = vunpack.c.l.b16 %v1061
    %v1341 = vunpack.c.h.b16 %v1061
    %v1342 = vunpack.c.l.b16 %v1062
    %v1343 = vunpack.c.h.b16 %v1062
    %v1344 = vunpack.c.l.b16 %v1063
    %v1345 = vunpack.c.h.b16 %v1063
    %v1346 = vunpack.c.l.b16 %v1064
    %v1347 = vunpack.c.h.b16 %v1064
    %v1348 = vunpack.c.l.b16 %v1065
    %v1349 = vunpack.c.h.b16 %v1065
    %v1350 = vunpack.c.l.b16 %v1066
    %v1351 = vunpack.c.h.b16 %v1066
    %v1352 = vunpack.c.l.b16 %v1067
    %v1353 = vunpack.c.h.b16 %v1067
    %v1354 = vunpack.c.l.b16 %v1068
    %v1355 = vunpack.c.h.b16 %v1068
    %v1356 = vunpack.c.l.b16 %v1069
    %v1357 = vunpack.c.h.b16 %v1069
    %v1358 = vunpack.c.l.b16 %v1070
    %v1359 = vunpack.c.h.b16 %v1070
    %v1360 = vunpack.c.l.b16 %v1071
    %v1361 = vunpack.c.h.b16 %v1071
    %v1362 = vunpack.c.l.b16 %v1072
    %v1363 = vunpack.c.h.b16 %v1072
    %v1364 = vunpack.c.l.b16 %v1073
    %v1365 = vunpack.c.h.b16 %v1073
    %v1366 = vunpack.c.l.b16 %v1074
    %v1367 = vunpack.c.h.b16 %v1074
    %v1368 = vunpack.c.l.b16 %v1075
    %v1369 = vunpack.c.h.b16 %v1075
    %v1370 = vunpack.c.l.b16 %v1076
    %v1371 = vunpack.c.h.b16 %v1076
    %v1372 = vunpack.c.l.b16 %v1077
    %v1373 = vunpack.c.h.b16 %v1077
    %v1374 = vunpack.c.l.b16 %v1078
    %v1375 = vunpack.c.h.b16 %v1078
    %v1376 = vunpack.c.l.b16 %v1079
    %v1377 = vunpack.c.h.b16 %v1079
    %v1378 = vunpack.c.l.b16 %v1080
    %v1379 = vunpack.c.h.b16 %v1080
    %v1380 = vunpack.c.l.b16 %v1081
    %v1381 = vunpack.c.h.b16 %v1081
    %v1382 = vunpack.c.l.b16 %v1082
    %v1383 = vunpack.c.h.b16 %v1082
    %v1384 = vunpack.c.l.b16 %v1083
    %v1385 = vunpack.c.h.b16 %v1083
    %v1386 = vunpack.c.l.b16 %v1084
    %v1387 = vunpack.c.h.b16 %v1084
    %v1388 = vunpack.c.l.b16 %v1085
    %v1389 = vunpack.c.h.b16 %v1085
    %v1390 = vunpack.c.l.b16 %v1086
    %v1391 = vunpack.c.h.b16 %v1086
    %v1392 = vunpack.c.l.b16 %v1087
    %v1393 = vunpack.c.h.b16 %v1087
    %v1394 = vunpack.c.l.b16 %v1088
    %v1395 = vunpack.c.h.b16 %v1088
    %v1396 = vunpack.c.l.b16 %v1089
    %v1397 = vunpack.c.h.b16 %v1089
    %v1398 = vunpack.c.l.b16 %v1090
    %v1399 = vunpack.c.h.b16 %v1090
    %v1400 = vunpack.c.l.b16 %v1091
    %v1401 = vunpack.c.h.b16 %v1091
    %v1402 = vunpack.c.l.b16 %v1092
    %v1403 = vunpack.c.h.b16 %v1092
    %v1404 = vunpack.c.l.b16 %v1093
    %v1405 = vunpack.c.h.b16 %v1093
    %v1406 = vunpack.c.l.b16 %v1094
    %v1407 = vunpack.c.h.b16 %v1094
    %v1408 = vunpack.c.l.b16 %v1095
    %v1409 = vunpack.c.h.b16 %v1095
    %v1410 = vunpack.c.l.b16 %v1096
    %v1411 = vunpack.c.h.b16 %v1096
    %v1412 = vunpack.c.l.b16 %v1097
    %v1413 = vunpack.c.h.b16 %v1097
    %v1414 = vunpack.c.l.b16 %v1098
    %v1415 = vunpack.c.h.b16 %v1098
    %v1416 = vunpack.c.l.b16 %v1099
    %v1417 = vunpack.c.h.b16 %v1099
    %v1418 = vunpack.c.l.b16 %v1100
    %v1419 = vunpack.c.h.b16 %v1100
    %v1420 = vunpack.c.l.b16 %v1101
    %v1421 = vunpack.c.h.b16 %v1101
    %v1422 = vunpack.c.l.b16 %v1102
    %v1423 = vunpack.c.h.b16 %v1102
    %v1424 = vunpack.c.l.b16 %v1103
    %v1425 = vunpack.c.h.b16 %v1103
    %v1426 = vunpack.c.l.b16 %v1104
    %v1427 = vunpack.c.h.b16 %v1104
    %v1428 = vunpack.c.l.b16 %v1105
    %v1429 = vunpack.c.h.b16 %v1105
    %v1430 = vunpack.c.l.b16 %v1106
    %v1431 = vunpack.c.h.b16 %v1106
    %v1432 = vunpack.c.l.b16 %v1107
    %v1433 = vunpack.c.h.b16 %v1107
    %v1434 = vunpack.c.l.b16 %v1108
    %v1435 = vunpack.c.h.b16 %v1108
    %v1436 = vunpack.c.l.b16 %v1109
    %v1437 = vunpack.c.h.b16 %v1109
    %v1438 = vunpack.c.l.b16 %v1110
    %v1439 = vunpack.c.h.b16 %v1110
    %v1440 = vunpack.c.l.b16 %v1111
    %v1441 = vunpack.c.h.b16 %v1111
    %v1442 = vunpack.c.l.b16 %v1112
    %v1443 = vunpack.c.h.b16 %v1112
    %v1444 = vunpack.c.l.b16 %v1113
    %v1445 = vunpack.c.h.b16 %v1113
    %v1446 = vunpack.c.l.b16 %v1114
    %v1447 = vunpack.c.h.b16 %v1114
    %v1448 = vunpack.c.l.b16 %v1115
    %v1449 = vunpack.c.h.b16 %v1115
    %v1450 = vunpack.c.l.b16 %v1116
    %v1451 = vunpack.c.h.b16 %v1116
    %v1452 = vunpack.c.l.b16 %v1117
    %v1453 = vunpack.c.h.b16 %v1117
    %v1454 = vunpack.c.l.b16 %v1118
    %v1455 = vunpack.c.h.b16 %v1118
    %v1456 = vunpack.c.l.b16 %v1119
    %v1457 = vunpack.c.h.b16 %v1119
    %v1458 = vunpack.c.l.b16 %v1120
    %v1459 = vunpack.c.h.b16 %v1120
    %v1460 = vunpack.c.l.b16 %v1121
    %v1461 = vunpack.c.h.b16 %v1121
    %v1462 = vunpack.c.l.b16 %v1122
    %v1463 = vunpack.c.h.b16 %v1122
    %v1464 = vunpack.c.l.b16 %v1123
    %v1465 = vunpack.c.h.b16 %v1123
    %v1466 = vunpack.c.l.b16 %v1124
    %v1467 = vunpack.c.h.b16 %v1124
    %v1468 = vunpack.c.l.b16 %v1125
    %v1469 = vunpack.c.h.b16 %v1125
    %v1470 = vunpack.c.l.b16 %v1126
    %v1471 = vunpack.c.h.b16 %v1126
    %v1472 = vunpack.c.l.b16 %v1127
    %v1473 = vunpack.c.h.b16 %v1127
    %v1474 = vunpack.c.l.b16 %v1128
    %v1475 = vunpack.c.h.b16 %v1128
    %v1476 = vunpack.c.l.b16 %v1129
    %v1477 = vunpack.c.h.b16 %v1129
    %v1478 = vunpack.c.l.b16 %v1130
    %v1479 = vunpack.c.h.b16 %v1130
    %v1480 = vunpack.c.l.b16 %v1131
    %v1481 = vunpack.c.h.b16 %v1131
    %v1482 = vunpack.c.l.b16 %v1132
    %v1483 = vunpack.c.h.b16 %v1132
    %v1484 = vunpack.c.l.b16 %v1133
    %v1485 = vunpack.c.h.b16 %v1133
    %v1486 = vunpack.c.l.b16 %v1134
    %v1487 = vunpack.c.h.b16 %v1134
    %v1488 = vunpack.c.l.b16 %v1135
    %v1489 = vunpack.c.h.b16 %v1135
    %v1490 = vunpack.c.l.b16 %v1136
    %v1491 = vunpack.c.h.b16 %v1136
    %v1492 = vunpack.c.l.b16 %v1137
    %v1493 = vunpack.c.h.b16 %v1137
    %v1494 = vunpack.c.l.b16 %v1138
    %v1495 = vunpack.c.h.b16 %v1138
    %v1496 = vunpack.c.l.b16 %v1139
    %v1497 = vunpack.c.h.b16 %v1139
    %v1498 = vunpack.c.l.b16 %v1140
    %v1499 = vunpack.c.h.b16 %v1140
    %v1500 = vunpack.c.l.b16 %v1141
    %v1501 = vunpack.c.h.b16 %v1141
    %v1502 = vunpack.c.l.b16 %v1142
    %v1503 = vunpack.c.h.b16 %v1142
    %v1504 = vunpack.c.l.b16 %v1143
    %v1505 = vunpack.c.h.b16 %v1143
    %v1506 = vunpack.c.l.b16 %v1144
    %v1507 = vunpack.c.h.b16 %v1144
    %v1508 = vunpack.c.l.b16 %v1145
    %v1509 = vunpack.c.h.b16 %v1145
    %v1510 = vunpack.c.l.b16 %v1146
    %v1511 = vunpack.c.h.b16 %v1146
    %v1512 = vunpack.c.l.b16 %v1147
    %v1513 = vunpack.c.h.b16 %v1147
    %v1514 = vunpack.c.l.b16 %v1148
    %v1515 = vunpack.c.h.b16 %v1148
    %v1516 = vunpack.c.l.b16 %v1149
    %v1517 = vunpack.c.h.b16 %v1149
    %v1518 = vunpack.c.l.b16 %v1150
    %v1519 = vunpack.c.h.b16 %v1150
    %v1520 = vunpack.c.l.b16 %v1151
    %v1521 = vunpack.c.h.b16 %v1151
    %v1522 = vunpack.c.l.b16 %v1152
    %v1523 = vunpack.c.h.b16 %v1152
    %v1524 = vunpack.c.l.b16 %v1153
    %v1525 = vunpack.c.h.b16 %v1153
    %v1526 = vunpack.c.l.b16 %v1154
    %v1527 = vunpack.c.h.b16 %v1154
    %v1528 = vunpack.c.l.b16 %v1155
    %v1529 = vunpack.c.h.b16 %v1155
    %v1530 = vunpack.c.l.b16 %v1156
    %v1531 = vunpack.c.h.b16 %v1156
    %v1532 = vunpack.c.l.b16 %v1157
    %v1533 = vunpack.c.h.b16 %v1157
    %v1534 = vunpack.c.l.b16 %v1158
    %v1535 = vunpack.c.h.b16 %v1158
    %v1536 = vunpack.c.l.b16 %v1159
    %v1537 = vunpack.c.h.b16 %v1159
    %v1538 = vunpack.c.l.b16 %v1160
    %v1539 = vunpack.c.h.b16 %v1160
    %v1540 = vunpack.c.l.b16 %v1161
    %v1541 = vunpack.c.h.b16 %v1161
    %v1542 = vunpack.c.l.b16 %v1162
    %v1543 = vunpack.c.h.b16 %v1162
    %v1544 = vunpack.c.l.b16 %v1163
    %v1545 = vunpack.c.h.b16 %v1163
    %v1546 = vunpack.c.l.b16 %v1164
    %v1547 = vunpack.c.h.b16 %v1164
    %v1548 = vunpack.c.l.b16 %v1165
    %v1549 = vunpack.c.h.b16 %v1165
    %v1550 = vunpack.c.l.b16 %v1166
    %v1551 = vunpack.c.h.b16 %v1166
    %v1552 = vunpack.c.l.b16 %v1167
    %v1553 = vunpack.c.h.b16 %v1167
    %v1554 = vunpack.c.l.b16 %v1168
    %v1555 = vunpack.c.h.b16 %v1168
    %v1556 = vunpack.c.l.b16 %v1169
    %v1557 = vunpack.c.h.b16 %v1169
    %v1558 = vunpack.c.l.b16 %v1170
    %v1559 = vunpack.c.h.b16 %v1170
    %v1560 = vunpack.c.l.b16 %v1171
    %v1561 = vunpack.c.h.b16 %v1171
    %v1562 = vunpack.c.l.b16 %v1172
    %v1563 = vunpack.c.h.b16 %v1172
    %v1564 = vunpack.c.l.b16 %v1173
    %v1565 = vunpack.c.h.b16 %v1173
    %v1566 = vunpack.c.l.b16 %v1174
    %v1567 = vunpack.c.h.b16 %v1174
    %v1568 = vunpack.c.l.b16 %v1175
    %v1569 = vunpack.c.h.b16 %v1175
    %v1570 = vunpack.c.l.b16 %v1176
    %v1571 = vunpack.c.h.b16 %v1176
    %v1572 = vunpack.c.l.b16 %v1177
    %v1573 = vunpack.c.h.b16 %v1177
    %v1574 = vpack.c.b16 %v1320, %v1318
    %v1575 = vpack.c.b16 %v1321, %v1319
    %v1576 = vpack.c.b16 %v1324, %v1322
    %v1577 = vpack.c.b16 %v1325, %v1323
    %v1578 = vpack.c.b16 %v1328, %v1326
    %v1579 = vpack.c.b16 %v1329, %v1327
    %v1580 = vpack.c.b16 %v1332, %v1330
    %v1581 = vpack.c.b16 %v1333, %v1331
    %v1582 = vpack.c.b16 %v1336, %v1334
    %v1583 = vpack.c.b16 %v1337, %v1335
    %v1584 = vpack.c.b16 %v1340, %v1338
    %v1585 = vpack.c.b16 %v1341, %v1339
    %v1586 = vpack.c.b16 %v1344, %v1342
    %v1587 = vpack.c.b16 %v1345, %v1343
    %v1588 = vpack.c.b16 %v1348, %v1346
    %v1589 = vpack.c.b16 %v1349, %v1347
    %v1590 = vpack.c.b16 %v1352, %v1350
    %v1591 = vpack.c.b16 %v1353, %v1351
    %v1592 = vpack.c.b16 %v1356, %v1354
    %v1593 = vpack.c.b16 %v1357, %v1355
    %v1594 = vpack.c.b16 %v1360, %v1358
    %v1595 = vpack.c.b16 %v1361, %v1359
    %v1596 = vpack.c.b16 %v1364, %v1362
    %v1597 = vpack.c.b16 %v1365, %v1363
    %v1598 = vpack.c.b16 %v1368, %v1366
    %v1599 = vpack.c.b16 %v1369, %v1367
    %v1600 = vpack.c.b16 %v1372, %v1370
    %v1601 = vpack.c.b16 %v1373, %v1371
    %v1602 = vpack.c.b16 %v1376, %v1374
    %v1603 = vpack.c.b16 %v1377, %v1375
    %v1604 = vpack.c.b16 %v1380, %v1378
    %v1605 = vpack.c.b16 %v1381, %v1379
    %v1606 = vpack.c.b16 %v1384, %v1382
    %v1607 = vpack.c.b16 %v1385, %v1383
    %v1608 = vpack.c.b16 %v1388, %v1386
    %v1609 = vpack.c.b16 %v1389, %v1387
    %v1610 = vpack.c.b16 %v1392, %v1390
    %v1611 = vpack.c.b16 %v1393, %v1391
    %v1612 = vpack.c.b16 %v1396, %v1394
    %v1613 = vpack.c.b16 %v1397, %v1395
    %v1614 = vpack.c.b16 %v1400, %v1398
    %v1615 = vpack.c.b16 %v1401, %v1399
    %v1616 = vpack.c.b16 %v1404, %v1402
    %v1617 = vpack.c.b16 %v1405, %v1403
    %v1618 = vpack.c.b16 %v1408, %v1406
    %v1619 = vpack.c.b16 %v1409, %v1407
    %v1620 = vpack.c.b16 %v1412, %v1410
    %v1621 = vpack.c.b16 %v1413, %v1411
    %v1622 = vpack.c.b16 %v1416, %v1414
    %v1623 = vpack.c.b16 %v1417, %v1415
    %v1624 = vpack.c.b16 %v1420, %v1418
    %v1625 = vpack.c.b16 %v1421, %v1419
    %v1626 = vpack.c.b16 %v1424, %v1422
    %v1627 = vpack.c.b16 %v1425, %v1423
    %v1628 = vpack.c.b16 %v1428, %v1426
    %v1629 = vpack.c.b16 %v1429, %v1427
    %v1630 = vpack.c.b16 %v1432, %v1430
    %v1631 = vpack.c.b16 %v1433, %v1431
    %v1632 = vpack.c.b16 %v1436, %v1434
    %v1633 = vpack.c.b16 %v1437, %v1435
    %v1634 = vpack.c.b16 %v1440, %v1438
    %v1635 = vpack.c.b16 %v1441, %v1439
    %v1636 = vpack.c.b16 %v1444, %v1442
    %v1637 = vpack.c.b16 %v1445, %v1443
    %v1638 = vpack.c.b16 %v1448, %v1446
    %v1639 = vpack.c.b16 %v1449, %v1447
    %v1640 = vpack.c.b16 %v1452, %v1450
    %v1641 = vpack.c.b16 %v1453, %v1451
    %v1642 = vpack.c.b16 %v1456, %v1454
    %v1643 = vpack.c.b16 %v1457, %v1455
    %v1644 = vpack.c.b16 %v1460, %v1458
    %v1645 = vpack.c.b16 %v1461, %v1459
    %v1646 = vpack.c.b16 %v1464, %v1462
    %v1647 = vpack.c.b16 %v1465, %v1463
    %v1648 = vpack.c.b16 %v1468, %v1466
    %v1649 = vpack.c.b16 %v1469, %v1467
    %v1650 = vpack.c.b16 %v1472, %v1470
    %v1651 = vpack.c.b16 %v1473, %v1471
    %v1652 = vpack.c.b16 %v1476, %v1474
    %v1653 = vpack.c.b16 %v1477, %v1475
    %v1654 = vpack.c.b16 %v1480, %v1478
    %v1655 = vpack.c.b16 %v1481, %v1479
    %v1656 = vpack.c.b16 %v1484, %v1482
    %v1657 = vpack.c.b16 %v1485, %v1483
    %v1658 = vpack.c.b16 %v1488, %v1486
    %v1659 = vpack.c.b16 %v1489, %v1487
    %v1660 = vpack.c.b16 %v1492, %v1490
    %v1661 = vpack.c.b16 %v1493, %v1491
    %v1662 = vpack.c.b16 %v1496, %v1494
    %v1663 = vpack.c.b16 %v1497, %v1495
    %v1664 = vpack.c.b16 %v1500, %v1498
    %v1665 = vpack.c.b16 %v1501, %v1499
    %v1666 = vpack.c.b16 %v1504, %v1502
    %v1667 = vpack.c.b16 %v1505, %v1503
    %v1668 = vpack.c.b16 %v1508, %v1506
    %v1669 = vpack.c.b16 %v1509, %v1507
    %v1670 = vpack.c.b16 %v1512, %v1510
    %v1671 = vpack.c.b16 %v1513, %v1511
    %v1672 = vpack.c.b16 %v1516, %v1514
    %v1673 = vpack.c.b16 %v1517, %v1515
    %v1674 = vpack.c.b16 %v1520, %v1518
    %v1675 = vpack.c.b16 %v1521, %v1519
    %v1676 = vpack.c.b16 %v1524, %v1522
    %v1677 = vpack.c.b16 %v1525, %v1523
    %v1678 = vpack.c.b16 %v1528, %v1526
    %v1679 = vpack.c.b16 %v1529, %v1527
    %v1680 = vpack.c.b16 %v1532, %v1530
    %v1681 = vpack.c.b16 %v1533, %v1531
    %v1682 = vpack.c.b16 %v1536, %v1534
    %v1683 = vpack.c.b16 %v1537, %v1535
    %v1684 = vpack.c.b16 %v1540, %v1538
    %v1685 = vpack.c.b16 %v1541, %v1539
    %v1686 = vpack.c.b16 %v1544, %v1542
    %v1687 = vpack.c.b16 %v1545, %v1543
    %v1688 = vpack.c.b16 %v1548, %v1546
    %v1689 = vpack.c.b16 %v1549, %v1547
    %v1690 = vpack.c.b16 %v1552, %v1550
    %v1691 = vpack.c.b16 %v1553, %v1551
    %v1692 = vpack.c.b16 %v1556, %v1554
    %v1693 = vpack.c.b16 %v1557, %v1555
    %v1694 = vpack.c.b16 %v1560, %v1558
    %v1695 = vpack.c.b16 %v1561, %v1559
    %v1696 = vpack.c.b16 %v1564, %v1562
    %v1697 = vpack.c.b16 %v1565, %v1563
    %v1698 = vpack.c.b16 %v1568, %v1566
    %v1699 = vpack.c.b16 %v1569, %v1567
    %v1700 = vpack.c.b16 %v1572, %v1570
    %v1701 = vpack.c.b16 %v1573, %v1571
    %1830 = vmatprep.subr.bf16.mxu0 %v1589
    %1831 = vmatpush1.bf16.msra.mxu0 %v1588
    %1832 = vmatprep.subr.bf16.mxu0 %v1587
    %1833 = vmatpush1.bf16.msra.mxu0 %v1586
    %1834 = vmatprep.subr.bf16.mxu0 %v1585
    %1835 = vmatpush1.bf16.msra.mxu0 %v1584
    %1836 = vmatprep.subr.bf16.mxu0 %v1583
    %1837 = vmatpush1.bf16.msra.mxu0 %v1582
    %1838 = vmatprep.subr.bf16.mxu0 %v1581
    %1839 = vmatpush1.bf16.msra.mxu0 %v1580
    %1840 = vmatprep.subr.bf16.mxu0 %v1579
    %1841 = vmatpush1.bf16.msra.mxu0 %v1578
    %1842 = vmatprep.subr.bf16.mxu0 %v1577
    %1843 = vmatpush1.bf16.msra.mxu0 %v1576
    %1844 = vmatprep.subr.bf16.mxu0 %v1575
    %1845 = vmatpush1.bf16.msra.mxu0 %v1574
    %1846 = vmatprep.subr.bf16.mxu0 %v1605
    %1847 = vmatpush2.bf16.msra.mxu0 %v1604
    %1848 = vmatprep.subr.bf16.mxu0 %v1603
    %1849 = vmatpush2.bf16.msra.mxu0 %v1602
    %1850 = vmatprep.subr.bf16.mxu0 %v1601
    %1851 = vmatpush2.bf16.msra.mxu0 %v1600
    %1852 = vmatprep.subr.bf16.mxu0 %v1599
    %1853 = vmatpush2.bf16.msra.mxu0 %v1598
    %1854 = vmatprep.subr.bf16.mxu0 %v1597
    %1855 = vmatpush2.bf16.msra.mxu0 %v1596
    %1856 = vmatprep.subr.bf16.mxu0 %v1595
    %1857 = vmatpush2.bf16.msra.mxu0 %v1594
    %1858 = vmatprep.subr.bf16.mxu0 %v1593
    %1859 = vmatpush2.bf16.msra.mxu0 %v1592
    %1860 = vmatprep.subr.bf16.mxu0 %v1591
    %1861 = vmatpush2.bf16.msra.mxu0 %v1590
    %1862 = vmatprep.mubr.bf16.mxu0 %v1043
    %1863 = vmatmul.mubr.bf16.gmra.mxu0 %v1042
    %v1864 = vpop.f32.mrf.mxu0
    %v1865 = vadd.f32 %v1183, %v1864
    %v1866 = vpop.f32.mrf.mxu0
    %v1867 = vadd.f32 %v1187, %v1866
    %v1868 = vpop.f32.mrf.mxu0
    %v1869 = vpop.f32.mrf.mxu0
    %1870 = vdwg.mxu0
    %1871 = vmatprep.subr.bf16.mxu0 %v1621
    %1872 = vmatpush1.bf16.msra.mxu0 %v1620
    %1873 = vmatprep.subr.bf16.mxu0 %v1619
    %1874 = vmatpush1.bf16.msra.mxu0 %v1618
    %1875 = vmatprep.subr.bf16.mxu0 %v1617
    %1876 = vmatpush1.bf16.msra.mxu0 %v1616
    %1877 = vmatprep.subr.bf16.mxu0 %v1615
    %1878 = vmatpush1.bf16.msra.mxu0 %v1614
    %1879 = vmatprep.subr.bf16.mxu0 %v1613
    %1880 = vmatpush1.bf16.msra.mxu0 %v1612
    %1881 = vmatprep.subr.bf16.mxu0 %v1611
    %1882 = vmatpush1.bf16.msra.mxu0 %v1610
    %1883 = vmatprep.subr.bf16.mxu0 %v1609
    %1884 = vmatpush1.bf16.msra.mxu0 %v1608
    %1885 = vmatprep.subr.bf16.mxu0 %v1607
    %1886 = vmatpush1.bf16.msra.mxu0 %v1606
    %1887 = vmatprep.subr.bf16.mxu0 %v1637
    %1888 = vmatpush2.bf16.msra.mxu0 %v1636
    %1889 = vmatprep.subr.bf16.mxu0 %v1635
    %1890 = vmatpush2.bf16.msra.mxu0 %v1634
    %1891 = vmatprep.subr.bf16.mxu0 %v1633
    %1892 = vmatpush2.bf16.msra.mxu0 %v1632
    %1893 = vmatprep.subr.bf16.mxu0 %v1631
    %1894 = vmatpush2.bf16.msra.mxu0 %v1630
    %1895 = vmatprep.subr.bf16.mxu0 %v1629
    %1896 = vmatpush2.bf16.msra.mxu0 %v1628
    %1897 = vmatprep.subr.bf16.mxu0 %v1627
    %1898 = vmatpush2.bf16.msra.mxu0 %v1626
    %1899 = vmatprep.subr.bf16.mxu0 %v1625
    %1900 = vmatpush2.bf16.msra.mxu0 %v1624
    %1901 = vmatprep.subr.bf16.mxu0 %v1623
    %1902 = vmatpush2.bf16.msra.mxu0 %v1622
    %1903 = vmatprep.mubr.bf16.mxu0 %v1045
    %1904 = vmatmul.mubr.bf16.gmra.mxu0 %v1044
    %v1905 = vpop.f32.mrf.mxu0
    %v1906 = vadd.f32 %v1865, %v1905
    %v1907 = vpop.f32.mrf.mxu0
    %v1908 = vadd.f32 %v1867, %v1907
    %v1909 = vpop.f32.mrf.mxu0
    %v1910 = vpop.f32.mrf.mxu0
    %1911 = vdwg.mxu0
    %1912 = vmatprep.subr.bf16.mxu0 %v1653
    %1913 = vmatpush1.bf16.msra.mxu0 %v1652
    %1914 = vmatprep.subr.bf16.mxu0 %v1651
    %1915 = vmatpush1.bf16.msra.mxu0 %v1650
    %1916 = vmatprep.subr.bf16.mxu0 %v1649
    %1917 = vmatpush1.bf16.msra.mxu0 %v1648
    %1918 = vmatprep.subr.bf16.mxu0 %v1647
    %1919 = vmatpush1.bf16.msra.mxu0 %v1646
    %1920 = vmatprep.subr.bf16.mxu0 %v1645
    %1921 = vmatpush1.bf16.msra.mxu0 %v1644
    %1922 = vmatprep.subr.bf16.mxu0 %v1643
    %1923 = vmatpush1.bf16.msra.mxu0 %v1642
    %1924 = vmatprep.subr.bf16.mxu0 %v1641
    %1925 = vmatpush1.bf16.msra.mxu0 %v1640
    %1926 = vmatprep.subr.bf16.mxu0 %v1639
    %1927 = vmatpush1.bf16.msra.mxu0 %v1638
    %1928 = vmatprep.subr.bf16.mxu0 %v1669
    %1929 = vmatpush2.bf16.msra.mxu0 %v1668
    %1930 = vmatprep.subr.bf16.mxu0 %v1667
    %1931 = vmatpush2.bf16.msra.mxu0 %v1666
    %1932 = vmatprep.subr.bf16.mxu0 %v1665
    %1933 = vmatpush2.bf16.msra.mxu0 %v1664
    %1934 = vmatprep.subr.bf16.mxu0 %v1663
    %1935 = vmatpush2.bf16.msra.mxu0 %v1662
    %1936 = vmatprep.subr.bf16.mxu0 %v1661
    %1937 = vmatpush2.bf16.msra.mxu0 %v1660
    %1938 = vmatprep.subr.bf16.mxu0 %v1659
    %1939 = vmatpush2.bf16.msra.mxu0 %v1658
    %1940 = vmatprep.subr.bf16.mxu0 %v1657
    %1941 = vmatpush2.bf16.msra.mxu0 %v1656
    %1942 = vmatprep.subr.bf16.mxu0 %v1655
    %1943 = vmatpush2.bf16.msra.mxu0 %v1654
    %1944 = vmatprep.mubr.bf16.mxu0 %v1047
    %1945 = vmatmul.mubr.bf16.gmra.mxu0 %v1046
    %v1946 = vpop.f32.mrf.mxu0
    %v1947 = vadd.f32 %v1906, %v1946
    %v1948 = vpop.f32.mrf.mxu0
    %v1949 = vadd.f32 %v1908, %v1948
    %v1950 = vpop.f32.mrf.mxu0
    %v1951 = vpop.f32.mrf.mxu0
    %1952 = vdwg.mxu0
    %1953 = vmatprep.subr.bf16.mxu0 %v1685
    %1954 = vmatpush1.bf16.msra.mxu0 %v1684
    %1955 = vmatprep.subr.bf16.mxu0 %v1683
    %1956 = vmatpush1.bf16.msra.mxu0 %v1682
    %1957 = vmatprep.subr.bf16.mxu0 %v1681
    %1958 = vmatpush1.bf16.msra.mxu0 %v1680
    %1959 = vmatprep.subr.bf16.mxu0 %v1679
    %1960 = vmatpush1.bf16.msra.mxu0 %v1678
    %1961 = vmatprep.subr.bf16.mxu0 %v1677
    %1962 = vmatpush1.bf16.msra.mxu0 %v1676
    %1963 = vmatprep.subr.bf16.mxu0 %v1675
    %1964 = vmatpush1.bf16.msra.mxu0 %v1674
    %1965 = vmatprep.subr.bf16.mxu0 %v1673
    %1966 = vmatpush1.bf16.msra.mxu0 %v1672
    %1967 = vmatprep.subr.bf16.mxu0 %v1671
    %1968 = vmatpush1.bf16.msra.mxu0 %v1670
    %1969 = vmatprep.subr.bf16.mxu0 %v1701
    %1970 = vmatpush2.bf16.msra.mxu0 %v1700
    %1971 = vmatprep.subr.bf16.mxu0 %v1699
    %1972 = vmatpush2.bf16.msra.mxu0 %v1698
    %1973 = vmatprep.subr.bf16.mxu0 %v1697
    %1974 = vmatpush2.bf16.msra.mxu0 %v1696
    %1975 = vmatprep.subr.bf16.mxu0 %v1695
    %1976 = vmatpush2.bf16.msra.mxu0 %v1694
    %1977 = vmatprep.subr.bf16.mxu0 %v1693
    %1978 = vmatpush2.bf16.msra.mxu0 %v1692
    %1979 = vmatprep.subr.bf16.mxu0 %v1691
    %1980 = vmatpush2.bf16.msra.mxu0 %v1690
    %1981 = vmatprep.subr.bf16.mxu0 %v1689
    %1982 = vmatpush2.bf16.msra.mxu0 %v1688
    %1983 = vmatprep.subr.bf16.mxu0 %v1687
    %1984 = vmatpush2.bf16.msra.mxu0 %v1686
    %1985 = vmatprep.mubr.bf16.mxu0 %v1049
    %1986 = vmatmul.mubr.bf16.gmra.mxu0 %v1048
    %v1987 = vpop.f32.mrf.mxu0
    %v1988 = vadd.f32 %v1947, %v1987
    %v1989 = vpop.f32.mrf.mxu0
    %v1990 = vadd.f32 %v1949, %v1989
    %v1991 = vpop.f32.mrf.mxu0
    %v1992 = vpop.f32.mrf.mxu0
    %1993 = vdwg.mxu0
    %v1994 = vmax.f32 %v1988, 0.0
    %v1995 = vmax.f32 %v1990, 0.0
    %v1996 = vpack.c.bf16 %v1994, %v1994
    %v1997 = vpack.c.bf16 %v1995, %v1995
    %v1998 = vld [vmem:[%s5] sm:$0xf]
    %v1999 = vld [vmem:[%s5 + $0x4] sm:$0xf]
    %v2000 = vld [vmem:[%s5 + $0x8] sm:$0xf]
    %v2001 = vld [vmem:[%s5 + $0xc] sm:$0xf]
    %v2002 = vld [vmem:[%s5 + $0x10] sm:$0xf]
    %v2003 = vld [vmem:[%s5 + $0x14] sm:$0xf]
    %v2004 = vld [vmem:[%s5 + $0x18] sm:$0xf]
    %v2005 = vld [vmem:[%s5 + $0x1c] sm:$0xf]
    %v2006 = vld [vmem:[%s5 + $0x20] sm:$0xf]
    %v2007 = vld [vmem:[%s5 + $0x24] sm:$0xf]
    %v2008 = vld [vmem:[%s5 + $0x28] sm:$0xf]
    %v2009 = vld [vmem:[%s5 + $0x2c] sm:$0xf]
    %v2010 = vld [vmem:[%s5 + $0x30] sm:$0xf]
    %v2011 = vld [vmem:[%s5 + $0x34] sm:$0xf]
    %v2012 = vld [vmem:[%s5 + $0x38] sm:$0xf]
    %v2013 = vld [vmem:[%s5 + $0x3c] sm:$0xf]
    %v2014 = vld [vmem:[%s5 + $0x40] sm:$0xf]
    %v2015 = vld [vmem:[%s5 + $0x44] sm:$0xf]
    %v2016 = vld [vmem:[%s5 + $0x48] sm:$0xf]
    %v2017 = vld [vmem:[%s5 + $0x4c] sm:$0xf]
    %v2018 = vld [vmem:[%s5 + $0x50] sm:$0xf]
    %v2019 = vld [vmem:[%s5 + $0x54] sm:$0xf]
    %v2020 = vld [vmem:[%s5 + $0x58] sm:$0xf]
    %v2021 = vld [vmem:[%s5 + $0x5c] sm:$0xf]
    %v2022 = vld [vmem:[%s5 + $0x60] sm:$0xf]
    %v2023 = vld [vmem:[%s5 + $0x64] sm:$0xf]
    %v2024 = vld [vmem:[%s5 + $0x68] sm:$0xf]
    %v2025 = vld [vmem:[%s5 + $0x6c] sm:$0xf]
    %v2026 = vld [vmem:[%s5 + $0x70] sm:$0xf]
    %v2027 = vld [vmem:[%s5 + $0x74] sm:$0xf]
    %v2028 = vld [vmem:[%s5 + $0x78] sm:$0xf]
    %v2029 = vld [vmem:[%s5 + $0x7c] sm:$0xf]
    %v2030 = vld [vmem:[%s6] sm:$0x1]
    %v2032 = vlaneseq
    %v2033 = vshrl.u32 %v2032, 7
    %v2034 = vsub.s32 0, %v2033
    %v2035 = vrot.slane %v2030, %v2034
    %v2069 = vunpack.c.l.b16 %v1998
    %v2070 = vunpack.c.l.b16 %v1999
    %v2071 = vunpack.c.l.b16 %v2000
    %v2072 = vunpack.c.l.b16 %v2001
    %v2073 = vunpack.c.l.b16 %v2002
    %v2074 = vunpack.c.l.b16 %v2003
    %v2075 = vunpack.c.l.b16 %v2004
    %v2076 = vunpack.c.l.b16 %v2005
    %v2077 = vunpack.c.l.b16 %v2006
    %v2078 = vunpack.c.l.b16 %v2007
    %v2079 = vunpack.c.l.b16 %v2008
    %v2080 = vunpack.c.l.b16 %v2009
    %v2081 = vunpack.c.l.b16 %v2010
    %v2082 = vunpack.c.l.b16 %v2011
    %v2083 = vunpack.c.l.b16 %v2012
    %v2084 = vunpack.c.l.b16 %v2013
    %v2085 = vunpack.c.l.b16 %v2014
    %v2086 = vunpack.c.l.b16 %v2015
    %v2087 = vunpack.c.l.b16 %v2016
    %v2088 = vunpack.c.l.b16 %v2017
    %v2089 = vunpack.c.l.b16 %v2018
    %v2090 = vunpack.c.l.b16 %v2019
    %v2091 = vunpack.c.l.b16 %v2020
    %v2092 = vunpack.c.l.b16 %v2021
    %v2093 = vunpack.c.l.b16 %v2022
    %v2094 = vunpack.c.l.b16 %v2023
    %v2095 = vunpack.c.l.b16 %v2024
    %v2096 = vunpack.c.l.b16 %v2025
    %v2097 = vunpack.c.l.b16 %v2026
    %v2098 = vunpack.c.l.b16 %v2027
    %v2099 = vunpack.c.l.b16 %v2028
    %v2100 = vunpack.c.l.b16 %v2029
    %v2101 = vpack.c.b16 %v2070, %v2069
    %v2102 = vpack.c.b16 %v2072, %v2071
    %v2103 = vpack.c.b16 %v2074, %v2073
    %v2104 = vpack.c.b16 %v2076, %v2075
    %v2105 = vpack.c.b16 %v2078, %v2077
    %v2106 = vpack.c.b16 %v2080, %v2079
    %v2107 = vpack.c.b16 %v2082, %v2081
    %v2108 = vpack.c.b16 %v2084, %v2083
    %v2109 = vpack.c.b16 %v2086, %v2085
    %v2110 = vpack.c.b16 %v2088, %v2087
    %v2111 = vpack.c.b16 %v2090, %v2089
    %v2112 = vpack.c.b16 %v2092, %v2091
    %v2113 = vpack.c.b16 %v2094, %v2093
    %v2114 = vpack.c.b16 %v2096, %v2095
    %v2115 = vpack.c.b16 %v2098, %v2097
    %v2116 = vpack.c.b16 %v2100, %v2099
    %2133 = vmatprep.subr.bf16.mxu0 0
    %2134 = vmatpush1.bf16.msra.mxu0 %v2108
    %2135 = vmatprep.subr.bf16.mxu0 0
    %2136 = vmatpush1.bf16.msra.mxu0 %v2107
    %2137 = vmatprep.subr.bf16.mxu0 0
    %2138 = vmatpush1.bf16.msra.mxu0 %v2106
    %2139 = vmatprep.subr.bf16.mxu0 0
    %2140 = vmatpush1.bf16.msra.mxu0 %v2105
    %2141 = vmatprep.subr.bf16.mxu0 0
    %2142 = vmatpush1.bf16.msra.mxu0 %v2104
    %2143 = vmatprep.subr.bf16.mxu0 0
    %2144 = vmatpush1.bf16.msra.mxu0 %v2103
    %2145 = vmatprep.subr.bf16.mxu0 0
    %2146 = vmatpush1.bf16.msra.mxu0 %v2102
    %2147 = vmatprep.subr.bf16.mxu0 0
    %2148 = vmatpush1.bf16.msra.mxu0 %v2101
    %2149 = vmatprep.subr.bf16.mxu0 0
    %2150 = vmatpush2.bf16.msra.mxu0 %v2116
    %2151 = vmatprep.subr.bf16.mxu0 0
    %2152 = vmatpush2.bf16.msra.mxu0 %v2115
    %2153 = vmatprep.subr.bf16.mxu0 0
    %2154 = vmatpush2.bf16.msra.mxu0 %v2114
    %2155 = vmatprep.subr.bf16.mxu0 0
    %2156 = vmatpush2.bf16.msra.mxu0 %v2113
    %2157 = vmatprep.subr.bf16.mxu0 0
    %2158 = vmatpush2.bf16.msra.mxu0 %v2112
    %2159 = vmatprep.subr.bf16.mxu0 0
    %2160 = vmatpush2.bf16.msra.mxu0 %v2111
    %2161 = vmatprep.subr.bf16.mxu0 0
    %2162 = vmatpush2.bf16.msra.mxu0 %v2110
    %2163 = vmatprep.subr.bf16.mxu0 0
    %2164 = vmatpush2.bf16.msra.mxu0 %v2109
    %2165 = vmatprep.mubr.bf16.mxu0 %v1997
    %2166 = vmatmul.mubr.bf16.gmra.mxu0 %v1996
    %v2167 = vpop.f32.mrf.mxu0
    %v2168 = vadd.f32 %v2035, %v2167
    %v2169 = vpop.f32.mrf.mxu0
    %v2170 = vpop.f32.mrf.mxu0
    %v2171 = vpop.f32.mrf.mxu0
    %2172 = vdwg.mxu0
    %vm2173 = vcmask 654336
    %2174 = vst.msk [vmem:[#allocation7] sm:$0xff] %vm2173, %v2168
    // Predicated region
    $region38: #{tpu_custom_call.1} parent=1 // pred_check
      _
    $region39: #{tpu_custom_call.1} parent=1 // pred_check_branch
      %2176 = sbr.rel (0) target = $region41
    $region40: #{tpu_custom_call.1} parent=1 // pred_region
      %s2178 = ssub.s32 128, 128
      %2179 = vsyncadd [#allocation4], %s2178
      %s2181 = sshll.u32 [#allocation7], 4
      %s2182 = int_to_ptr.vmem [resolvable:$true] %s2181
      %2184 = dma.vmem_to_hbm [thread:$0]  %s2182, 128, %s7, [#allocation4]
    $region41: #{tpu_custom_call.1} parent=1 // pred_fallthru
      _
    // Predicated region
    $region42: #{tpu_custom_call.1} parent=1 // pred_check
      _
    $region43: #{tpu_custom_call.1} parent=1 // pred_check_branch
      %2186 = sbr.rel (0) target = $region45
    $region44: #{tpu_custom_call.1} parent=1 // pred_region
      %2187 = dma.done [#allocation4], 128
    $region45: #{tpu_custom_call.1} parent=1 // pred_fallthru
      _
    %2188 = vsyncpa [#allocation3], 1
    %2189 = vsyncpa [#allocation6], 1
    %2190 = vsyncpa [#allocation4], 1

</llo_original>
